<compile_context>
chip_gen: v5e
topology: v5e:2x2
jax: 0.10.0
libtpu: 0.0.40
codegen_flags: <defaults>
</compile_context>

<pallas_src>
import math
import functools

import jax
import jax.numpy as jnp
from jax.experimental import pallas as pl
from jax.experimental.pallas import tpu as pltpu


# ----------------------------- Pallas kernel ------------------------------

def _discriminator_kernel(x_ref, mask_ref, pos_bias_ref,
                          ln_attn_ref, wqkv_ref, wo_ref,
                          ln_ff_ref, wi_ref, wo_ff_ref,
                          final_ln_ref, cls_w_ref, cls_b_ref,
                          logits_ref,
                          *, B, S, num_heads, d_kv, num_layers, eps):
    """Entire T5-encoder + classifier forward for the whole batch.

    x_ref:        (B, S, D)        token embeddings (f32)
    mask_ref:     (B, 1, S)        additive key mask (0 / -1e9, f32)
    pos_bias_ref: (H, S, S)        shared relative-position bias (f32)
    ln_attn_ref:  (L, 1, D) f32    per-layer attention pre-norm weight
    wqkv_ref:     (L, D, 3*H*dk)   bf16 fused q|k|v projection
    wo_ref:       (L, H*dk, D)     bf16 output projection
    ln_ff_ref:    (L, 1, D) f32    per-layer FFN pre-norm weight
    wi_ref:       (L, D, d_ff)     bf16
    wo_ff_ref:    (L, d_ff, D)     bf16
    final_ln_ref: (1, D) f32       final RMSNorm weight
    cls_w_ref:    (D, N) bf16      classifier weight
    cls_b_ref:    (1, N) f32       classifier bias
    logits_ref:   (B, N)           output
    """
    D = x_ref.shape[2]
    inner = num_heads * d_kv
    bf16 = jnp.bfloat16

    # Residual stream, flattened to (B*S, D) so every matmul / norm sees a
    # full 16-row sublane slab instead of two 8-row ones.
    x = x_ref[...].astype(jnp.float32).reshape(B * S, D)

    # Layer-invariant combined additive bias (rel-pos bias + padding mask),
    # computed once and kept resident across all layers.  f32 on purpose.
    bias = [[pos_bias_ref[h] + mask_ref[b]            # (S, S) each
             for h in range(num_heads)] for b in range(B)]

    def rmsnorm(v, g):
        # T5 RMSNorm: x * rsqrt(mean(x^2) + eps) * weight   (all f32)
        var = jnp.mean(v * v, axis=-1, keepdims=True)
        return v * jax.lax.rsqrt(var + eps) * g

    for l in range(num_layers):                       # static unroll (L small)
        # -------- self-attention block --------
        normed = rmsnorm(x, ln_attn_ref[l]).astype(bf16)          # (BS, D)
        qkv = jnp.dot(normed, wqkv_ref[l],
                      preferred_element_type=jnp.float32)          # (BS, 3*inner)
        wo_l = wo_ref[l]                                           # (inner, D) bf16

        # NOTE: at real T5-base dims (H=12, d_kv=64) this (b, h) unroll should
        # become a batched dot_general over a folded (B*H) axis; at the toy
        # dims here the static unroll keeps Mosaic lowering trivial.
        attn_rows = []
        for b in range(B):
            qkv_b = qkv[b * S:(b + 1) * S]                         # (S, 3*inner)
            acc = jnp.zeros((S, D), jnp.float32)
            for h in range(num_heads):
                q = qkv_b[:, h * d_kv:(h + 1) * d_kv].astype(bf16)
                k = qkv_b[:, inner + h * d_kv:
                          inner + (h + 1) * d_kv].astype(bf16)
                v = qkv_b[:, 2 * inner + h * d_kv:
                          2 * inner + (h + 1) * d_kv].astype(bf16)
                # T5: attention scores are NOT scaled by 1/sqrt(d_kv)
                scores = jax.lax.dot_general(
                    q, k, (((1,), (1,)), ((), ())),
                    preferred_element_type=jnp.float32)            # (S, S) f32
                scores = scores + bias[b][h]
                scores = scores - jnp.max(scores, axis=-1, keepdims=True)
                p = jnp.exp(scores)
                # approx reciprocal rides the free EUP slot; use approx=False
                # when validating bit-parity against the PyTorch reference.
                p = p * pl.reciprocal(jnp.sum(p, axis=-1, keepdims=True),
                                      approx=True)
                head_out = jnp.dot(p.astype(bf16), v,
                                   preferred_element_type=jnp.float32)  # (S, dk)
                # a @ wo == sum_h head_out_h @ wo[h*dk:(h+1)*dk]
                acc = acc + jnp.dot(head_out.astype(bf16),
                                    wo_l[h * d_kv:(h + 1) * d_kv, :],
                                    preferred_element_type=jnp.float32)
            attn_rows.append(acc)
        x = x + jnp.concatenate(attn_rows, axis=0)                 # (BS, D)

        # -------- feed-forward block (ReLU) --------
        normed = rmsnorm(x, ln_ff_ref[l]).astype(bf16)
        hmid = jnp.maximum(
            jnp.dot(normed, wi_ref[l], preferred_element_type=jnp.float32), 0.0)
        x = x + jnp.dot(hmid.astype(bf16), wo_ff_ref[l],
                        preferred_element_type=jnp.float32)

    # -------- classifier head on token 0 (fused) --------
    x0 = jnp.concatenate([x[b * S:b * S + 1, :] for b in range(B)], axis=0)
    normed0 = rmsnorm(x0, final_ln_ref[...])                       # (B, D) f32
    logits = jnp.dot(normed0.astype(bf16), cls_w_ref[...],
                     preferred_element_type=jnp.float32) + cls_b_ref[...]
    logits_ref[...] = logits.astype(logits_ref.dtype)


def fused_discriminator(x_emb, mask_bias, pos_bias,
                        ln_attn, wqkv, wo, ln_ff, wi, wo_ff,
                        final_ln, cls_w, cls_b, cfg):
    B, S, D = x_emb.shape
    L, H, dk = cfg.num_layers, cfg.num_heads, cfg.d_kv
    d_ff, N = cfg.d_ff, cfg.num_labels
    inner = H * dk

    kernel = functools.partial(_discriminator_kernel, B=B, S=S,
                               num_heads=H, d_kv=dk,
                               num_layers=L, eps=cfg.eps)

    def full(shape):
        # Whole array resident in VMEM for the single grid step.
        return pl.BlockSpec(shape, lambda i: (0,) * len(shape))

    return pl.pallas_call(
        kernel,
        grid=(1,),
        in_specs=[
            full((B, S, D)),            # x (residual stream)
            full((B, 1, S)),            # additive padding mask
            full((H, S, S)),            # shared rel-pos bias
            full((L, 1, D)),            # ln_attn (stacked)
            full((L, D, 3 * inner)),    # wqkv (stacked, bf16)
            full((L, inner, D)),        # wo (stacked, bf16)
            full((L, 1, D)),            # ln_ff (stacked)
            full((L, D, d_ff)),         # wi (stacked, bf16)
            full((L, d_ff, D)),         # wo_ff (stacked, bf16)
            full((1, D)),               # final_ln
            full((D, N)),               # classifier weight (bf16)
            full((1, N)),               # classifier bias
        ],
        out_specs=full((B, N)),
        out_shape=jax.ShapeDtypeStruct((B, N), jnp.float32),
        # grid=(1,): single TensorCore on v7x is accepted at these toy dims
        # (dispatch-bound); on v5e/v6e there is only one TC anyway.
        compiler_params=pltpu.CompilerParams(
            dimension_semantics=("arbitrary",)),
    )(x_emb, mask_bias, pos_bias, ln_attn, wqkv, wo, ln_ff, wi, wo_ff,
      final_ln, cls_w, cls_b)


# ------------------------- T5 encoder glue (JAX) --------------------------

class Config:
    vocab_size = 128
    d_model = 32
    num_heads = 4
    d_kv = 8
    d_ff = 64
    num_layers = 2
    rel_buckets = 32
    rel_max_distance = 128
    eps = 1e-6
    num_labels = 2


def _relative_position_bucket(relative_position, num_buckets, max_distance):
    # Bidirectional bucketing, as in HF T5Attention._relative_position_bucket.
    num_buckets = num_buckets // 2
    relative_buckets = (relative_position > 0).astype(jnp.int32) * num_buckets
    rp = jnp.abs(relative_position)
    max_exact = num_buckets // 2
    is_small = rp < max_exact
    rp_large = max_exact + (
        jnp.log(jnp.maximum(rp, 1).astype(jnp.float32) / max_exact)
        / math.log(max_distance / max_exact)
        * (num_buckets - max_exact)
    ).astype(jnp.int32)
    rp_large = jnp.minimum(rp_large, num_buckets - 1)
    return relative_buckets + jnp.where(is_small, rp, rp_large)


def compute_position_bias(rel_table, S, cfg):
    """Shared relative-position bias: (H, S, S). Plain XLA (gather)."""
    ctx = jnp.arange(S)[:, None]
    mem = jnp.arange(S)[None, :]
    buckets = _relative_position_bucket(mem - ctx, cfg.rel_buckets,
                                        cfg.rel_max_distance)
    values = rel_table[buckets]                        # (S, S, H)
    return jnp.transpose(values, (2, 0, 1))            # (H, S, S)


def init_params(key, cfg):
    def nrm(k, shape, scale=0.02):
        return scale * jax.random.normal(k, shape, jnp.float32)

    keys = iter(jax.random.split(key, 16))
    inner = cfg.num_heads * cfg.d_kv
    L, D = cfg.num_layers, cfg.d_model
    # Per-layer weights are stored STACKED on a leading L axis so the whole
    # encoder fits in one pallas_call.
    return {
        "embed": nrm(next(keys), (cfg.vocab_size, D)),
        "rel_bias": nrm(next(keys), (cfg.rel_buckets, cfg.num_heads)),
        "ln_attn": jnp.ones((L, 1, D), jnp.float32),
        "wqkv": nrm(next(keys), (L, D, 3 * inner)),     # fused q|k|v
        "wo": nrm(next(keys), (L, inner, D)),
        "ln_ff": jnp.ones((L, 1, D), jnp.float32),
        "wi": nrm(next(keys), (L, D, cfg.d_ff)),
        "wo_ff": nrm(next(keys), (L, cfg.d_ff, D)),
        "final_ln": jnp.ones((1, D), jnp.float32),
        "cls_w": nrm(next(keys), (D, cfg.num_labels)),
        "cls_b": jnp.zeros((1, cfg.num_labels), jnp.float32),
    }


def discriminator_forward(params, input_ids, attention_mask, cfg):
    B, S = input_ids.shape

    # Token embedding lookup (gather stays in XLA).
    x = params["embed"][input_ids]                                  # (B, S, D)

    # Additive padding key-mask (B, 1, S) and shared rel-pos bias (H, S, S);
    # their combination (hoisted, layer-invariant) happens inside the kernel.
    mask_bias = ((1.0 - attention_mask.astype(jnp.float32)) * -1e9
                 ).reshape(B, 1, S)
    pos_bias = compute_position_bias(params["rel_bias"], S, cfg)    # (H, S, S)

    # bf16 weights at the MXU boundary (f32 accumulation in-kernel).
    bf16 = jnp.bfloat16
    return fused_discriminator(
        x, mask_bias, pos_bias,
        params["ln_attn"], params["wqkv"].astype(bf16), params["wo"].astype(bf16),
        params["ln_ff"], params["wi"].astype(bf16), params["wo_ff"].astype(bf16),
        params["final_ln"], params["cls_w"].astype(bf16), params["cls_b"],
        cfg)


if __name__ == "__main__":
    cfg = Config()
    key = jax.random.PRNGKey(0)
    pkey, ikey = jax.random.split(key)
    params = init_params(pkey, cfg)

    B, S = 2, 8
    input_ids = jax.random.randint(ikey, (B, S), 0, cfg.vocab_size,
                                   dtype=jnp.int32)
    attention_mask = jnp.ones((B, S), jnp.int32).at[1, 6:].set(0)   # padding

    fwd = jax.jit(functools.partial(discriminator_forward, cfg=cfg))
    logits = fwd(params, input_ids, attention_mask)
    jax.block_until_ready(logits)
    assert logits.shape == (B, cfg.num_labels)
    assert bool(jnp.all(jnp.isfinite(logits)))
    print("KERNEL_OK")
</pallas_src>

<mosaic_0001>
module attributes {stable_mosaic.version = 11 : i64} {
  func.func @_discriminator_kernel(%arg0: i32, %arg1: memref<2x8x32xf32, #tpu.memory_space<vmem>>, %arg2: memref<2x1x8xf32, #tpu.memory_space<vmem>>, %arg3: memref<4x8x8xf32, #tpu.memory_space<vmem>>, %arg4: memref<2x1x32xf32, #tpu.memory_space<vmem>>, %arg5: memref<2x32x96xbf16, #tpu.memory_space<vmem>>, %arg6: memref<2x32x32xbf16, #tpu.memory_space<vmem>>, %arg7: memref<2x1x32xf32, #tpu.memory_space<vmem>>, %arg8: memref<2x32x64xbf16, #tpu.memory_space<vmem>>, %arg9: memref<2x64x32xbf16, #tpu.memory_space<vmem>>, %arg10: memref<1x32xf32, #tpu.memory_space<vmem>>, %arg11: memref<32x2xbf16, #tpu.memory_space<vmem>>, %arg12: memref<1x2xf32, #tpu.memory_space<vmem>>, %arg13: memref<2x2xf32, #tpu.memory_space<vmem>>) attributes {dimension_semantics = [#tpu.dimension_semantics<arbitrary>], iteration_bounds = array<i64: 1>, scalar_prefetch = 0 : i64, scratch_operands = 0 : i64, tpu.core_type = #tpu.core_type<tc>, window_params = [{pipeline_mode = #tpu.pipeline_mode<synchronous>, transform_indices = @transform_0, window_bounds = array<i64: 2, 8, 32>}, {pipeline_mode = #tpu.pipeline_mode<synchronous>, transform_indices = @transform_1, window_bounds = array<i64: 2, 1, 8>}, {pipeline_mode = #tpu.pipeline_mode<synchronous>, transform_indices = @transform_2, window_bounds = array<i64: 4, 8, 8>}, {pipeline_mode = #tpu.pipeline_mode<synchronous>, transform_indices = @transform_3, window_bounds = array<i64: 2, 1, 32>}, {pipeline_mode = #tpu.pipeline_mode<synchronous>, transform_indices = @transform_4, window_bounds = array<i64: 2, 32, 96>}, {pipeline_mode = #tpu.pipeline_mode<synchronous>, transform_indices = @transform_5, window_bounds = array<i64: 2, 32, 32>}, {pipeline_mode = #tpu.pipeline_mode<synchronous>, transform_indices = @transform_6, window_bounds = array<i64: 2, 1, 32>}, {pipeline_mode = #tpu.pipeline_mode<synchronous>, transform_indices = @transform_7, window_bounds = array<i64: 2, 32, 64>}, {pipeline_mode = #tpu.pipeline_mode<synchronous>, transform_indices = @transform_8, window_bounds = array<i64: 2, 64, 32>}, {pipeline_mode = #tpu.pipeline_mode<synchronous>, transform_indices = @transform_9, window_bounds = array<i64: 1, 32>}, {pipeline_mode = #tpu.pipeline_mode<synchronous>, transform_indices = @transform_10, window_bounds = array<i64: 32, 2>}, {pipeline_mode = #tpu.pipeline_mode<synchronous>, transform_indices = @transform_11, window_bounds = array<i64: 1, 2>}, {pipeline_mode = #tpu.pipeline_mode<synchronous>, transform_indices = @transform_12, window_bounds = array<i64: 2, 2>}]} {
    %c0 = arith.constant 0 : index
    %c0_0 = arith.constant 0 : index
    %c0_1 = arith.constant 0 : index
    %0 = vector.load %arg1[%c0, %c0_0, %c0_1] : memref<2x8x32xf32, #tpu.memory_space<vmem>>, vector<2x8x32xf32>
    %1 = vector.shape_cast %0 : vector<2x8x32xf32> to vector<16x32xf32>
    %c0_2 = arith.constant 0 : index
    %c0_3 = arith.constant 0 : index
    %c0_4 = arith.constant 0 : index
    %2 = vector.load %arg3[%c0_2, %c0_3, %c0_4] : memref<4x8x8xf32, #tpu.memory_space<vmem>>, vector<1x8x8xf32>
    %3 = vector.shape_cast %2 : vector<1x8x8xf32> to vector<8x8xf32>
    %c0_5 = arith.constant 0 : index
    %c0_6 = arith.constant 0 : index
    %c0_7 = arith.constant 0 : index
    %4 = vector.load %arg2[%c0_5, %c0_6, %c0_7] : memref<2x1x8xf32, #tpu.memory_space<vmem>>, vector<1x1x8xf32>
    %5 = vector.shape_cast %4 : vector<1x1x8xf32> to vector<1x8xf32>
    %6 = vector.broadcast %5 : vector<1x8xf32> to vector<8x8xf32>
    %7 = arith.addf %3, %6 : vector<8x8xf32>
    %c1 = arith.constant 1 : index
    %c0_8 = arith.constant 0 : index
    %c0_9 = arith.constant 0 : index
    %8 = vector.load %arg3[%c1, %c0_8, %c0_9] : memref<4x8x8xf32, #tpu.memory_space<vmem>>, vector<1x8x8xf32>
    %9 = vector.shape_cast %8 : vector<1x8x8xf32> to vector<8x8xf32>
    %c0_10 = arith.constant 0 : index
    %c0_11 = arith.constant 0 : index
    %c0_12 = arith.constant 0 : index
    %10 = vector.load %arg2[%c0_10, %c0_11, %c0_12] : memref<2x1x8xf32, #tpu.memory_space<vmem>>, vector<1x1x8xf32>
    %11 = vector.shape_cast %10 : vector<1x1x8xf32> to vector<1x8xf32>
    %12 = vector.broadcast %11 : vector<1x8xf32> to vector<8x8xf32>
    %13 = arith.addf %9, %12 : vector<8x8xf32>
    %c2 = arith.constant 2 : index
    %c0_13 = arith.constant 0 : index
    %c0_14 = arith.constant 0 : index
    %14 = vector.load %arg3[%c2, %c0_13, %c0_14] : memref<4x8x8xf32, #tpu.memory_space<vmem>>, vector<1x8x8xf32>
    %15 = vector.shape_cast %14 : vector<1x8x8xf32> to vector<8x8xf32>
    %c0_15 = arith.constant 0 : index
    %c0_16 = arith.constant 0 : index
    %c0_17 = arith.constant 0 : index
    %16 = vector.load %arg2[%c0_15, %c0_16, %c0_17] : memref<2x1x8xf32, #tpu.memory_space<vmem>>, vector<1x1x8xf32>
    %17 = vector.shape_cast %16 : vector<1x1x8xf32> to vector<1x8xf32>
    %18 = vector.broadcast %17 : vector<1x8xf32> to vector<8x8xf32>
    %19 = arith.addf %15, %18 : vector<8x8xf32>
    %c3 = arith.constant 3 : index
    %c0_18 = arith.constant 0 : index
    %c0_19 = arith.constant 0 : index
    %20 = vector.load %arg3[%c3, %c0_18, %c0_19] : memref<4x8x8xf32, #tpu.memory_space<vmem>>, vector<1x8x8xf32>
    %21 = vector.shape_cast %20 : vector<1x8x8xf32> to vector<8x8xf32>
    %c0_20 = arith.constant 0 : index
    %c0_21 = arith.constant 0 : index
    %c0_22 = arith.constant 0 : index
    %22 = vector.load %arg2[%c0_20, %c0_21, %c0_22] : memref<2x1x8xf32, #tpu.memory_space<vmem>>, vector<1x1x8xf32>
    %23 = vector.shape_cast %22 : vector<1x1x8xf32> to vector<1x8xf32>
    %24 = vector.broadcast %23 : vector<1x8xf32> to vector<8x8xf32>
    %25 = arith.addf %21, %24 : vector<8x8xf32>
    %c0_23 = arith.constant 0 : index
    %c0_24 = arith.constant 0 : index
    %c0_25 = arith.constant 0 : index
    %26 = vector.load %arg3[%c0_23, %c0_24, %c0_25] : memref<4x8x8xf32, #tpu.memory_space<vmem>>, vector<1x8x8xf32>
    %27 = vector.shape_cast %26 : vector<1x8x8xf32> to vector<8x8xf32>
    %c1_26 = arith.constant 1 : index
    %c0_27 = arith.constant 0 : index
    %c0_28 = arith.constant 0 : index
    %28 = vector.load %arg2[%c1_26, %c0_27, %c0_28] : memref<2x1x8xf32, #tpu.memory_space<vmem>>, vector<1x1x8xf32>
    %29 = vector.shape_cast %28 : vector<1x1x8xf32> to vector<1x8xf32>
    %30 = vector.broadcast %29 : vector<1x8xf32> to vector<8x8xf32>
    %31 = arith.addf %27, %30 : vector<8x8xf32>
    %c1_29 = arith.constant 1 : index
    %c0_30 = arith.constant 0 : index
    %c0_31 = arith.constant 0 : index
    %32 = vector.load %arg3[%c1_29, %c0_30, %c0_31] : memref<4x8x8xf32, #tpu.memory_space<vmem>>, vector<1x8x8xf32>
    %33 = vector.shape_cast %32 : vector<1x8x8xf32> to vector<8x8xf32>
    %c1_32 = arith.constant 1 : index
    %c0_33 = arith.constant 0 : index
    %c0_34 = arith.constant 0 : index
    %34 = vector.load %arg2[%c1_32, %c0_33, %c0_34] : memref<2x1x8xf32, #tpu.memory_space<vmem>>, vector<1x1x8xf32>
    %35 = vector.shape_cast %34 : vector<1x1x8xf32> to vector<1x8xf32>
    %36 = vector.broadcast %35 : vector<1x8xf32> to vector<8x8xf32>
    %37 = arith.addf %33, %36 : vector<8x8xf32>
    %c2_35 = arith.constant 2 : index
    %c0_36 = arith.constant 0 : index
    %c0_37 = arith.constant 0 : index
    %38 = vector.load %arg3[%c2_35, %c0_36, %c0_37] : memref<4x8x8xf32, #tpu.memory_space<vmem>>, vector<1x8x8xf32>
    %39 = vector.shape_cast %38 : vector<1x8x8xf32> to vector<8x8xf32>
    %c1_38 = arith.constant 1 : index
    %c0_39 = arith.constant 0 : index
    %c0_40 = arith.constant 0 : index
    %40 = vector.load %arg2[%c1_38, %c0_39, %c0_40] : memref<2x1x8xf32, #tpu.memory_space<vmem>>, vector<1x1x8xf32>
    %41 = vector.shape_cast %40 : vector<1x1x8xf32> to vector<1x8xf32>
    %42 = vector.broadcast %41 : vector<1x8xf32> to vector<8x8xf32>
    %43 = arith.addf %39, %42 : vector<8x8xf32>
    %c3_41 = arith.constant 3 : index
    %c0_42 = arith.constant 0 : index
    %c0_43 = arith.constant 0 : index
    %44 = vector.load %arg3[%c3_41, %c0_42, %c0_43] : memref<4x8x8xf32, #tpu.memory_space<vmem>>, vector<1x8x8xf32>
    %45 = vector.shape_cast %44 : vector<1x8x8xf32> to vector<8x8xf32>
    %c1_44 = arith.constant 1 : index
    %c0_45 = arith.constant 0 : index
    %c0_46 = arith.constant 0 : index
    %46 = vector.load %arg2[%c1_44, %c0_45, %c0_46] : memref<2x1x8xf32, #tpu.memory_space<vmem>>, vector<1x1x8xf32>
    %47 = vector.shape_cast %46 : vector<1x1x8xf32> to vector<1x8xf32>
    %48 = vector.broadcast %47 : vector<1x8xf32> to vector<8x8xf32>
    %49 = arith.addf %45, %48 : vector<8x8xf32>
    %c0_47 = arith.constant 0 : index
    %c0_48 = arith.constant 0 : index
    %c0_49 = arith.constant 0 : index
    %50 = vector.load %arg4[%c0_47, %c0_48, %c0_49] : memref<2x1x32xf32, #tpu.memory_space<vmem>>, vector<1x1x32xf32>
    %51 = vector.shape_cast %50 : vector<1x1x32xf32> to vector<1x32xf32>
    %52 = arith.mulf %1, %1 : vector<16x32xf32>
    %cst = arith.constant dense<0.000000e+00> : vector<16xf32>
    %53 = vector.multi_reduction <add>, %52, %cst [1] : vector<16x32xf32> to vector<16xf32>
    %54 = vector.shape_cast %53 : vector<16xf32> to vector<16x1xf32>
    %cst_50 = arith.constant 3.200000e+01 : f32
    %55 = vector.broadcast %cst_50 : f32 to vector<16x1xf32>
    %56 = arith.divf %54, %55 : vector<16x1xf32>
    %cst_51 = arith.constant 9.99999997E-7 : f32
    %57 = vector.broadcast %cst_51 : f32 to vector<16x1xf32>
    %58 = arith.addf %56, %57 : vector<16x1xf32>
    %59 = math.rsqrt %58 : vector<16x1xf32>
    %60 = vector.broadcast %59 : vector<16x1xf32> to vector<16x32xf32>
    %61 = arith.mulf %1, %60 : vector<16x32xf32>
    %62 = vector.broadcast %51 : vector<1x32xf32> to vector<16x32xf32>
    %63 = arith.mulf %61, %62 : vector<16x32xf32>
    %64 = arith.truncf %63 : vector<16x32xf32> to vector<16x32xbf16>
    %c0_52 = arith.constant 0 : index
    %c0_53 = arith.constant 0 : index
    %c0_54 = arith.constant 0 : index
    %65 = vector.load %arg5[%c0_52, %c0_53, %c0_54] : memref<2x32x96xbf16, #tpu.memory_space<vmem>>, vector<1x32x96xbf16>
    %66 = vector.shape_cast %65 : vector<1x32x96xbf16> to vector<32x96xbf16>
    %cst_55 = arith.constant dense<0.000000e+00> : vector<16x96xf32>
    %67 = tpu.matmul %64, %66, %cst_55 {dimension_numbers = #tpu.dot_dimension_numbers<[1], [0], [0], [1], [0, 0, 1, 1], [], []>} : vector<16x32xbf16>, vector<32x96xbf16>, vector<16x96xf32> -> vector<16x96xf32>
    %c0_56 = arith.constant 0 : index
    %c0_57 = arith.constant 0 : index
    %c0_58 = arith.constant 0 : index
    %68 = vector.load %arg6[%c0_56, %c0_57, %c0_58] : memref<2x32x32xbf16, #tpu.memory_space<vmem>>, vector<1x32x32xbf16>
    %69 = vector.shape_cast %68 : vector<1x32x32xbf16> to vector<32x32xbf16>
    %70 = vector.extract_strided_slice %67 {offsets = [0, 0], sizes = [8, 96], strides = [1, 1]} : vector<16x96xf32> to vector<8x96xf32>
    %cst_59 = arith.constant 0.000000e+00 : f32
    %71 = vector.broadcast %cst_59 : f32 to vector<8x32xf32>
    %72 = vector.extract_strided_slice %70 {offsets = [0, 0], sizes = [8, 8], strides = [1, 1]} : vector<8x96xf32> to vector<8x8xf32>
    %73 = arith.truncf %72 : vector<8x8xf32> to vector<8x8xbf16>
    %74 = vector.extract_strided_slice %70 {offsets = [0, 32], sizes = [8, 8], strides = [1, 1]} : vector<8x96xf32> to vector<8x8xf32>
    %75 = arith.truncf %74 : vector<8x8xf32> to vector<8x8xbf16>
    %76 = vector.extract_strided_slice %70 {offsets = [0, 64], sizes = [8, 8], strides = [1, 1]} : vector<8x96xf32> to vector<8x8xf32>
    %77 = arith.truncf %76 : vector<8x8xf32> to vector<8x8xbf16>
    %cst_60 = arith.constant dense<0.000000e+00> : vector<8x8xf32>
    %78 = tpu.matmul %73, %75, %cst_60 {dimension_numbers = #tpu.dot_dimension_numbers<[1], [1], [0], [0], [0, 0, 1, 0], [], []>} : vector<8x8xbf16>, vector<8x8xbf16>, vector<8x8xf32> -> vector<8x8xf32>
    %79 = arith.addf %78, %7 : vector<8x8xf32>
    %cst_61 = arith.constant dense<0xFF800000> : vector<8xf32>
    %80 = vector.multi_reduction <maximumf>, %79, %cst_61 [1] : vector<8x8xf32> to vector<8xf32>
    %81 = vector.shape_cast %80 : vector<8xf32> to vector<8x1xf32>
    %82 = vector.broadcast %81 : vector<8x1xf32> to vector<8x8xf32>
    %83 = arith.subf %79, %82 : vector<8x8xf32>
    %84 = math.exp %83 : vector<8x8xf32>
    %cst_62 = arith.constant dense<0.000000e+00> : vector<8xf32>
    %85 = vector.multi_reduction <add>, %84, %cst_62 [1] : vector<8x8xf32> to vector<8xf32>
    %86 = vector.shape_cast %85 : vector<8xf32> to vector<8x1xf32>
    %87 = tpu.reciprocal %86 {approx = true} : vector<8x1xf32> -> vector<8x1xf32>
    %88 = vector.broadcast %87 : vector<8x1xf32> to vector<8x8xf32>
    %89 = arith.mulf %84, %88 : vector<8x8xf32>
    %90 = arith.truncf %89 : vector<8x8xf32> to vector<8x8xbf16>
    %cst_63 = arith.constant dense<0.000000e+00> : vector<8x8xf32>
    %91 = tpu.matmul %90, %77, %cst_63 {dimension_numbers = #tpu.dot_dimension_numbers<[1], [0], [0], [1], [0, 0, 1, 1], [], []>} : vector<8x8xbf16>, vector<8x8xbf16>, vector<8x8xf32> -> vector<8x8xf32>
    %92 = arith.truncf %91 : vector<8x8xf32> to vector<8x8xbf16>
    %93 = vector.extract_strided_slice %69 {offsets = [0, 0], sizes = [8, 32], strides = [1, 1]} : vector<32x32xbf16> to vector<8x32xbf16>
    %cst_64 = arith.constant dense<0.000000e+00> : vector<8x32xf32>
    %94 = tpu.matmul %92, %93, %cst_64 {dimension_numbers = #tpu.dot_dimension_numbers<[1], [0], [0], [1], [0, 0, 1, 1], [], []>} : vector<8x8xbf16>, vector<8x32xbf16>, vector<8x32xf32> -> vector<8x32xf32>
    %95 = arith.addf %71, %94 : vector<8x32xf32>
    %96 = vector.extract_strided_slice %70 {offsets = [0, 8], sizes = [8, 8], strides = [1, 1]} : vector<8x96xf32> to vector<8x8xf32>
    %97 = arith.truncf %96 : vector<8x8xf32> to vector<8x8xbf16>
    %98 = vector.extract_strided_slice %70 {offsets = [0, 40], sizes = [8, 8], strides = [1, 1]} : vector<8x96xf32> to vector<8x8xf32>
    %99 = arith.truncf %98 : vector<8x8xf32> to vector<8x8xbf16>
    %100 = vector.extract_strided_slice %70 {offsets = [0, 72], sizes = [8, 8], strides = [1, 1]} : vector<8x96xf32> to vector<8x8xf32>
    %101 = arith.truncf %100 : vector<8x8xf32> to vector<8x8xbf16>
    %cst_65 = arith.constant dense<0.000000e+00> : vector<8x8xf32>
    %102 = tpu.matmul %97, %99, %cst_65 {dimension_numbers = #tpu.dot_dimension_numbers<[1], [1], [0], [0], [0, 0, 1, 0], [], []>} : vector<8x8xbf16>, vector<8x8xbf16>, vector<8x8xf32> -> vector<8x8xf32>
    %103 = arith.addf %102, %13 : vector<8x8xf32>
    %cst_66 = arith.constant dense<0xFF800000> : vector<8xf32>
    %104 = vector.multi_reduction <maximumf>, %103, %cst_66 [1] : vector<8x8xf32> to vector<8xf32>
    %105 = vector.shape_cast %104 : vector<8xf32> to vector<8x1xf32>
    %106 = vector.broadcast %105 : vector<8x1xf32> to vector<8x8xf32>
    %107 = arith.subf %103, %106 : vector<8x8xf32>
    %108 = math.exp %107 : vector<8x8xf32>
    %cst_67 = arith.constant dense<0.000000e+00> : vector<8xf32>
    %109 = vector.multi_reduction <add>, %108, %cst_67 [1] : vector<8x8xf32> to vector<8xf32>
    %110 = vector.shape_cast %109 : vector<8xf32> to vector<8x1xf32>
    %111 = tpu.reciprocal %110 {approx = true} : vector<8x1xf32> -> vector<8x1xf32>
    %112 = vector.broadcast %111 : vector<8x1xf32> to vector<8x8xf32>
    %113 = arith.mulf %108, %112 : vector<8x8xf32>
    %114 = arith.truncf %113 : vector<8x8xf32> to vector<8x8xbf16>
    %cst_68 = arith.constant dense<0.000000e+00> : vector<8x8xf32>
    %115 = tpu.matmul %114, %101, %cst_68 {dimension_numbers = #tpu.dot_dimension_numbers<[1], [0], [0], [1], [0, 0, 1, 1], [], []>} : vector<8x8xbf16>, vector<8x8xbf16>, vector<8x8xf32> -> vector<8x8xf32>
    %116 = arith.truncf %115 : vector<8x8xf32> to vector<8x8xbf16>
    %117 = vector.extract_strided_slice %69 {offsets = [8, 0], sizes = [8, 32], strides = [1, 1]} : vector<32x32xbf16> to vector<8x32xbf16>
    %cst_69 = arith.constant dense<0.000000e+00> : vector<8x32xf32>
    %118 = tpu.matmul %116, %117, %cst_69 {dimension_numbers = #tpu.dot_dimension_numbers<[1], [0], [0], [1], [0, 0, 1, 1], [], []>} : vector<8x8xbf16>, vector<8x32xbf16>, vector<8x32xf32> -> vector<8x32xf32>
    %119 = arith.addf %95, %118 : vector<8x32xf32>
    %120 = vector.extract_strided_slice %70 {offsets = [0, 16], sizes = [8, 8], strides = [1, 1]} : vector<8x96xf32> to vector<8x8xf32>
    %121 = arith.truncf %120 : vector<8x8xf32> to vector<8x8xbf16>
    %122 = vector.extract_strided_slice %70 {offsets = [0, 48], sizes = [8, 8], strides = [1, 1]} : vector<8x96xf32> to vector<8x8xf32>
    %123 = arith.truncf %122 : vector<8x8xf32> to vector<8x8xbf16>
    %124 = vector.extract_strided_slice %70 {offsets = [0, 80], sizes = [8, 8], strides = [1, 1]} : vector<8x96xf32> to vector<8x8xf32>
    %125 = arith.truncf %124 : vector<8x8xf32> to vector<8x8xbf16>
    %cst_70 = arith.constant dense<0.000000e+00> : vector<8x8xf32>
    %126 = tpu.matmul %121, %123, %cst_70 {dimension_numbers = #tpu.dot_dimension_numbers<[1], [1], [0], [0], [0, 0, 1, 0], [], []>} : vector<8x8xbf16>, vector<8x8xbf16>, vector<8x8xf32> -> vector<8x8xf32>
    %127 = arith.addf %126, %19 : vector<8x8xf32>
    %cst_71 = arith.constant dense<0xFF800000> : vector<8xf32>
    %128 = vector.multi_reduction <maximumf>, %127, %cst_71 [1] : vector<8x8xf32> to vector<8xf32>
    %129 = vector.shape_cast %128 : vector<8xf32> to vector<8x1xf32>
    %130 = vector.broadcast %129 : vector<8x1xf32> to vector<8x8xf32>
    %131 = arith.subf %127, %130 : vector<8x8xf32>
    %132 = math.exp %131 : vector<8x8xf32>
    %cst_72 = arith.constant dense<0.000000e+00> : vector<8xf32>
    %133 = vector.multi_reduction <add>, %132, %cst_72 [1] : vector<8x8xf32> to vector<8xf32>
    %134 = vector.shape_cast %133 : vector<8xf32> to vector<8x1xf32>
    %135 = tpu.reciprocal %134 {approx = true} : vector<8x1xf32> -> vector<8x1xf32>
    %136 = vector.broadcast %135 : vector<8x1xf32> to vector<8x8xf32>
    %137 = arith.mulf %132, %136 : vector<8x8xf32>
    %138 = arith.truncf %137 : vector<8x8xf32> to vector<8x8xbf16>
    %cst_73 = arith.constant dense<0.000000e+00> : vector<8x8xf32>
    %139 = tpu.matmul %138, %125, %cst_73 {dimension_numbers = #tpu.dot_dimension_numbers<[1], [0], [0], [1], [0, 0, 1, 1], [], []>} : vector<8x8xbf16>, vector<8x8xbf16>, vector<8x8xf32> -> vector<8x8xf32>
    %140 = arith.truncf %139 : vector<8x8xf32> to vector<8x8xbf16>
    %141 = vector.extract_strided_slice %69 {offsets = [16, 0], sizes = [8, 32], strides = [1, 1]} : vector<32x32xbf16> to vector<8x32xbf16>
    %cst_74 = arith.constant dense<0.000000e+00> : vector<8x32xf32>
    %142 = tpu.matmul %140, %141, %cst_74 {dimension_numbers = #tpu.dot_dimension_numbers<[1], [0], [0], [1], [0, 0, 1, 1], [], []>} : vector<8x8xbf16>, vector<8x32xbf16>, vector<8x32xf32> -> vector<8x32xf32>
    %143 = arith.addf %119, %142 : vector<8x32xf32>
    %144 = vector.extract_strided_slice %70 {offsets = [0, 24], sizes = [8, 8], strides = [1, 1]} : vector<8x96xf32> to vector<8x8xf32>
    %145 = arith.truncf %144 : vector<8x8xf32> to vector<8x8xbf16>
    %146 = vector.extract_strided_slice %70 {offsets = [0, 56], sizes = [8, 8], strides = [1, 1]} : vector<8x96xf32> to vector<8x8xf32>
    %147 = arith.truncf %146 : vector<8x8xf32> to vector<8x8xbf16>
    %148 = vector.extract_strided_slice %70 {offsets = [0, 88], sizes = [8, 8], strides = [1, 1]} : vector<8x96xf32> to vector<8x8xf32>
    %149 = arith.truncf %148 : vector<8x8xf32> to vector<8x8xbf16>
    %cst_75 = arith.constant dense<0.000000e+00> : vector<8x8xf32>
    %150 = tpu.matmul %145, %147, %cst_75 {dimension_numbers = #tpu.dot_dimension_numbers<[1], [1], [0], [0], [0, 0, 1, 0], [], []>} : vector<8x8xbf16>, vector<8x8xbf16>, vector<8x8xf32> -> vector<8x8xf32>
    %151 = arith.addf %150, %25 : vector<8x8xf32>
    %cst_76 = arith.constant dense<0xFF800000> : vector<8xf32>
    %152 = vector.multi_reduction <maximumf>, %151, %cst_76 [1] : vector<8x8xf32> to vector<8xf32>
    %153 = vector.shape_cast %152 : vector<8xf32> to vector<8x1xf32>
    %154 = vector.broadcast %153 : vector<8x1xf32> to vector<8x8xf32>
    %155 = arith.subf %151, %154 : vector<8x8xf32>
    %156 = math.exp %155 : vector<8x8xf32>
    %cst_77 = arith.constant dense<0.000000e+00> : vector<8xf32>
    %157 = vector.multi_reduction <add>, %156, %cst_77 [1] : vector<8x8xf32> to vector<8xf32>
    %158 = vector.shape_cast %157 : vector<8xf32> to vector<8x1xf32>
    %159 = tpu.reciprocal %158 {approx = true} : vector<8x1xf32> -> vector<8x1xf32>
    %160 = vector.broadcast %159 : vector<8x1xf32> to vector<8x8xf32>
    %161 = arith.mulf %156, %160 : vector<8x8xf32>
    %162 = arith.truncf %161 : vector<8x8xf32> to vector<8x8xbf16>
    %cst_78 = arith.constant dense<0.000000e+00> : vector<8x8xf32>
    %163 = tpu.matmul %162, %149, %cst_78 {dimension_numbers = #tpu.dot_dimension_numbers<[1], [0], [0], [1], [0, 0, 1, 1], [], []>} : vector<8x8xbf16>, vector<8x8xbf16>, vector<8x8xf32> -> vector<8x8xf32>
    %164 = arith.truncf %163 : vector<8x8xf32> to vector<8x8xbf16>
    %165 = vector.extract_strided_slice %69 {offsets = [24, 0], sizes = [8, 32], strides = [1, 1]} : vector<32x32xbf16> to vector<8x32xbf16>
    %cst_79 = arith.constant dense<0.000000e+00> : vector<8x32xf32>
    %166 = tpu.matmul %164, %165, %cst_79 {dimension_numbers = #tpu.dot_dimension_numbers<[1], [0], [0], [1], [0, 0, 1, 1], [], []>} : vector<8x8xbf16>, vector<8x32xbf16>, vector<8x32xf32> -> vector<8x32xf32>
    %167 = arith.addf %143, %166 : vector<8x32xf32>
    %168 = vector.extract_strided_slice %67 {offsets = [8, 0], sizes = [8, 96], strides = [1, 1]} : vector<16x96xf32> to vector<8x96xf32>
    %cst_80 = arith.constant 0.000000e+00 : f32
    %169 = vector.broadcast %cst_80 : f32 to vector<8x32xf32>
    %170 = vector.extract_strided_slice %168 {offsets = [0, 0], sizes = [8, 8], strides = [1, 1]} : vector<8x96xf32> to vector<8x8xf32>
    %171 = arith.truncf %170 : vector<8x8xf32> to vector<8x8xbf16>
    %172 = vector.extract_strided_slice %168 {offsets = [0, 32], sizes = [8, 8], strides = [1, 1]} : vector<8x96xf32> to vector<8x8xf32>
    %173 = arith.truncf %172 : vector<8x8xf32> to vector<8x8xbf16>
    %174 = vector.extract_strided_slice %168 {offsets = [0, 64], sizes = [8, 8], strides = [1, 1]} : vector<8x96xf32> to vector<8x8xf32>
    %175 = arith.truncf %174 : vector<8x8xf32> to vector<8x8xbf16>
    %cst_81 = arith.constant dense<0.000000e+00> : vector<8x8xf32>
    %176 = tpu.matmul %171, %173, %cst_81 {dimension_numbers = #tpu.dot_dimension_numbers<[1], [1], [0], [0], [0, 0, 1, 0], [], []>} : vector<8x8xbf16>, vector<8x8xbf16>, vector<8x8xf32> -> vector<8x8xf32>
    %177 = arith.addf %176, %31 : vector<8x8xf32>
    %cst_82 = arith.constant dense<0xFF800000> : vector<8xf32>
    %178 = vector.multi_reduction <maximumf>, %177, %cst_82 [1] : vector<8x8xf32> to vector<8xf32>
    %179 = vector.shape_cast %178 : vector<8xf32> to vector<8x1xf32>
    %180 = vector.broadcast %179 : vector<8x1xf32> to vector<8x8xf32>
    %181 = arith.subf %177, %180 : vector<8x8xf32>
    %182 = math.exp %181 : vector<8x8xf32>
    %cst_83 = arith.constant dense<0.000000e+00> : vector<8xf32>
    %183 = vector.multi_reduction <add>, %182, %cst_83 [1] : vector<8x8xf32> to vector<8xf32>
    %184 = vector.shape_cast %183 : vector<8xf32> to vector<8x1xf32>
    %185 = tpu.reciprocal %184 {approx = true} : vector<8x1xf32> -> vector<8x1xf32>
    %186 = vector.broadcast %185 : vector<8x1xf32> to vector<8x8xf32>
    %187 = arith.mulf %182, %186 : vector<8x8xf32>
    %188 = arith.truncf %187 : vector<8x8xf32> to vector<8x8xbf16>
    %cst_84 = arith.constant dense<0.000000e+00> : vector<8x8xf32>
    %189 = tpu.matmul %188, %175, %cst_84 {dimension_numbers = #tpu.dot_dimension_numbers<[1], [0], [0], [1], [0, 0, 1, 1], [], []>} : vector<8x8xbf16>, vector<8x8xbf16>, vector<8x8xf32> -> vector<8x8xf32>
    %190 = arith.truncf %189 : vector<8x8xf32> to vector<8x8xbf16>
    %191 = vector.extract_strided_slice %69 {offsets = [0, 0], sizes = [8, 32], strides = [1, 1]} : vector<32x32xbf16> to vector<8x32xbf16>
    %cst_85 = arith.constant dense<0.000000e+00> : vector<8x32xf32>
    %192 = tpu.matmul %190, %191, %cst_85 {dimension_numbers = #tpu.dot_dimension_numbers<[1], [0], [0], [1], [0, 0, 1, 1], [], []>} : vector<8x8xbf16>, vector<8x32xbf16>, vector<8x32xf32> -> vector<8x32xf32>
    %193 = arith.addf %169, %192 : vector<8x32xf32>
    %194 = vector.extract_strided_slice %168 {offsets = [0, 8], sizes = [8, 8], strides = [1, 1]} : vector<8x96xf32> to vector<8x8xf32>
    %195 = arith.truncf %194 : vector<8x8xf32> to vector<8x8xbf16>
    %196 = vector.extract_strided_slice %168 {offsets = [0, 40], sizes = [8, 8], strides = [1, 1]} : vector<8x96xf32> to vector<8x8xf32>
    %197 = arith.truncf %196 : vector<8x8xf32> to vector<8x8xbf16>
    %198 = vector.extract_strided_slice %168 {offsets = [0, 72], sizes = [8, 8], strides = [1, 1]} : vector<8x96xf32> to vector<8x8xf32>
    %199 = arith.truncf %198 : vector<8x8xf32> to vector<8x8xbf16>
    %cst_86 = arith.constant dense<0.000000e+00> : vector<8x8xf32>
    %200 = tpu.matmul %195, %197, %cst_86 {dimension_numbers = #tpu.dot_dimension_numbers<[1], [1], [0], [0], [0, 0, 1, 0], [], []>} : vector<8x8xbf16>, vector<8x8xbf16>, vector<8x8xf32> -> vector<8x8xf32>
    %201 = arith.addf %200, %37 : vector<8x8xf32>
    %cst_87 = arith.constant dense<0xFF800000> : vector<8xf32>
    %202 = vector.multi_reduction <maximumf>, %201, %cst_87 [1] : vector<8x8xf32> to vector<8xf32>
    %203 = vector.shape_cast %202 : vector<8xf32> to vector<8x1xf32>
    %204 = vector.broadcast %203 : vector<8x1xf32> to vector<8x8xf32>
    %205 = arith.subf %201, %204 : vector<8x8xf32>
    %206 = math.exp %205 : vector<8x8xf32>
    %cst_88 = arith.constant dense<0.000000e+00> : vector<8xf32>
    %207 = vector.multi_reduction <add>, %206, %cst_88 [1] : vector<8x8xf32> to vector<8xf32>
    %208 = vector.shape_cast %207 : vector<8xf32> to vector<8x1xf32>
    %209 = tpu.reciprocal %208 {approx = true} : vector<8x1xf32> -> vector<8x1xf32>
    %210 = vector.broadcast %209 : vector<8x1xf32> to vector<8x8xf32>
    %211 = arith.mulf %206, %210 : vector<8x8xf32>
    %212 = arith.truncf %211 : vector<8x8xf32> to vector<8x8xbf16>
    %cst_89 = arith.constant dense<0.000000e+00> : vector<8x8xf32>
    %213 = tpu.matmul %212, %199, %cst_89 {dimension_numbers = #tpu.dot_dimension_numbers<[1], [0], [0], [1], [0, 0, 1, 1], [], []>} : vector<8x8xbf16>, vector<8x8xbf16>, vector<8x8xf32> -> vector<8x8xf32>
    %214 = arith.truncf %213 : vector<8x8xf32> to vector<8x8xbf16>
    %215 = vector.extract_strided_slice %69 {offsets = [8, 0], sizes = [8, 32], strides = [1, 1]} : vector<32x32xbf16> to vector<8x32xbf16>
    %cst_90 = arith.constant dense<0.000000e+00> : vector<8x32xf32>
    %216 = tpu.matmul %214, %215, %cst_90 {dimension_numbers = #tpu.dot_dimension_numbers<[1], [0], [0], [1], [0, 0, 1, 1], [], []>} : vector<8x8xbf16>, vector<8x32xbf16>, vector<8x32xf32> -> vector<8x32xf32>
    %217 = arith.addf %193, %216 : vector<8x32xf32>
    %218 = vector.extract_strided_slice %168 {offsets = [0, 16], sizes = [8, 8], strides = [1, 1]} : vector<8x96xf32> to vector<8x8xf32>
    %219 = arith.truncf %218 : vector<8x8xf32> to vector<8x8xbf16>
    %220 = vector.extract_strided_slice %168 {offsets = [0, 48], sizes = [8, 8], strides = [1, 1]} : vector<8x96xf32> to vector<8x8xf32>
    %221 = arith.truncf %220 : vector<8x8xf32> to vector<8x8xbf16>
    %222 = vector.extract_strided_slice %168 {offsets = [0, 80], sizes = [8, 8], strides = [1, 1]} : vector<8x96xf32> to vector<8x8xf32>
    %223 = arith.truncf %222 : vector<8x8xf32> to vector<8x8xbf16>
    %cst_91 = arith.constant dense<0.000000e+00> : vector<8x8xf32>
    %224 = tpu.matmul %219, %221, %cst_91 {dimension_numbers = #tpu.dot_dimension_numbers<[1], [1], [0], [0], [0, 0, 1, 0], [], []>} : vector<8x8xbf16>, vector<8x8xbf16>, vector<8x8xf32> -> vector<8x8xf32>
    %225 = arith.addf %224, %43 : vector<8x8xf32>
    %cst_92 = arith.constant dense<0xFF800000> : vector<8xf32>
    %226 = vector.multi_reduction <maximumf>, %225, %cst_92 [1] : vector<8x8xf32> to vector<8xf32>
    %227 = vector.shape_cast %226 : vector<8xf32> to vector<8x1xf32>
    %228 = vector.broadcast %227 : vector<8x1xf32> to vector<8x8xf32>
    %229 = arith.subf %225, %228 : vector<8x8xf32>
    %230 = math.exp %229 : vector<8x8xf32>
    %cst_93 = arith.constant dense<0.000000e+00> : vector<8xf32>
    %231 = vector.multi_reduction <add>, %230, %cst_93 [1] : vector<8x8xf32> to vector<8xf32>
    %232 = vector.shape_cast %231 : vector<8xf32> to vector<8x1xf32>
    %233 = tpu.reciprocal %232 {approx = true} : vector<8x1xf32> -> vector<8x1xf32>
    %234 = vector.broadcast %233 : vector<8x1xf32> to vector<8x8xf32>
    %235 = arith.mulf %230, %234 : vector<8x8xf32>
    %236 = arith.truncf %235 : vector<8x8xf32> to vector<8x8xbf16>
    %cst_94 = arith.constant dense<0.000000e+00> : vector<8x8xf32>
    %237 = tpu.matmul %236, %223, %cst_94 {dimension_numbers = #tpu.dot_dimension_numbers<[1], [0], [0], [1], [0, 0, 1, 1], [], []>} : vector<8x8xbf16>, vector<8x8xbf16>, vector<8x8xf32> -> vector<8x8xf32>
    %238 = arith.truncf %237 : vector<8x8xf32> to vector<8x8xbf16>
    %239 = vector.extract_strided_slice %69 {offsets = [16, 0], sizes = [8, 32], strides = [1, 1]} : vector<32x32xbf16> to vector<8x32xbf16>
    %cst_95 = arith.constant dense<0.000000e+00> : vector<8x32xf32>
    %240 = tpu.matmul %238, %239, %cst_95 {dimension_numbers = #tpu.dot_dimension_numbers<[1], [0], [0], [1], [0, 0, 1, 1], [], []>} : vector<8x8xbf16>, vector<8x32xbf16>, vector<8x32xf32> -> vector<8x32xf32>
    %241 = arith.addf %217, %240 : vector<8x32xf32>
    %242 = vector.extract_strided_slice %168 {offsets = [0, 24], sizes = [8, 8], strides = [1, 1]} : vector<8x96xf32> to vector<8x8xf32>
    %243 = arith.truncf %242 : vector<8x8xf32> to vector<8x8xbf16>
    %244 = vector.extract_strided_slice %168 {offsets = [0, 56], sizes = [8, 8], strides = [1, 1]} : vector<8x96xf32> to vector<8x8xf32>
    %245 = arith.truncf %244 : vector<8x8xf32> to vector<8x8xbf16>
    %246 = vector.extract_strided_slice %168 {offsets = [0, 88], sizes = [8, 8], strides = [1, 1]} : vector<8x96xf32> to vector<8x8xf32>
    %247 = arith.truncf %246 : vector<8x8xf32> to vector<8x8xbf16>
    %cst_96 = arith.constant dense<0.000000e+00> : vector<8x8xf32>
    %248 = tpu.matmul %243, %245, %cst_96 {dimension_numbers = #tpu.dot_dimension_numbers<[1], [1], [0], [0], [0, 0, 1, 0], [], []>} : vector<8x8xbf16>, vector<8x8xbf16>, vector<8x8xf32> -> vector<8x8xf32>
    %249 = arith.addf %248, %49 : vector<8x8xf32>
    %cst_97 = arith.constant dense<0xFF800000> : vector<8xf32>
    %250 = vector.multi_reduction <maximumf>, %249, %cst_97 [1] : vector<8x8xf32> to vector<8xf32>
    %251 = vector.shape_cast %250 : vector<8xf32> to vector<8x1xf32>
    %252 = vector.broadcast %251 : vector<8x1xf32> to vector<8x8xf32>
    %253 = arith.subf %249, %252 : vector<8x8xf32>
    %254 = math.exp %253 : vector<8x8xf32>
    %cst_98 = arith.constant dense<0.000000e+00> : vector<8xf32>
    %255 = vector.multi_reduction <add>, %254, %cst_98 [1] : vector<8x8xf32> to vector<8xf32>
    %256 = vector.shape_cast %255 : vector<8xf32> to vector<8x1xf32>
    %257 = tpu.reciprocal %256 {approx = true} : vector<8x1xf32> -> vector<8x1xf32>
    %258 = vector.broadcast %257 : vector<8x1xf32> to vector<8x8xf32>
    %259 = arith.mulf %254, %258 : vector<8x8xf32>
    %260 = arith.truncf %259 : vector<8x8xf32> to vector<8x8xbf16>
    %cst_99 = arith.constant dense<0.000000e+00> : vector<8x8xf32>
    %261 = tpu.matmul %260, %247, %cst_99 {dimension_numbers = #tpu.dot_dimension_numbers<[1], [0], [0], [1], [0, 0, 1, 1], [], []>} : vector<8x8xbf16>, vector<8x8xbf16>, vector<8x8xf32> -> vector<8x8xf32>
    %262 = arith.truncf %261 : vector<8x8xf32> to vector<8x8xbf16>
    %263 = vector.extract_strided_slice %69 {offsets = [24, 0], sizes = [8, 32], strides = [1, 1]} : vector<32x32xbf16> to vector<8x32xbf16>
    %cst_100 = arith.constant dense<0.000000e+00> : vector<8x32xf32>
    %264 = tpu.matmul %262, %263, %cst_100 {dimension_numbers = #tpu.dot_dimension_numbers<[1], [0], [0], [1], [0, 0, 1, 1], [], []>} : vector<8x8xbf16>, vector<8x32xbf16>, vector<8x32xf32> -> vector<8x32xf32>
    %265 = arith.addf %241, %264 : vector<8x32xf32>
    %266 = tpu.concatenate %167, %265 in 0 : vector<8x32xf32>, vector<8x32xf32> -> vector<16x32xf32>
    %267 = arith.addf %1, %266 : vector<16x32xf32>
    %c0_101 = arith.constant 0 : index
    %c0_102 = arith.constant 0 : index
    %c0_103 = arith.constant 0 : index
    %268 = vector.load %arg7[%c0_101, %c0_102, %c0_103] : memref<2x1x32xf32, #tpu.memory_space<vmem>>, vector<1x1x32xf32>
    %269 = vector.shape_cast %268 : vector<1x1x32xf32> to vector<1x32xf32>
    %270 = arith.mulf %267, %267 : vector<16x32xf32>
    %cst_104 = arith.constant dense<0.000000e+00> : vector<16xf32>
    %271 = vector.multi_reduction <add>, %270, %cst_104 [1] : vector<16x32xf32> to vector<16xf32>
    %272 = vector.shape_cast %271 : vector<16xf32> to vector<16x1xf32>
    %cst_105 = arith.constant 3.200000e+01 : f32
    %273 = vector.broadcast %cst_105 : f32 to vector<16x1xf32>
    %274 = arith.divf %272, %273 : vector<16x1xf32>
    %cst_106 = arith.constant 9.99999997E-7 : f32
    %275 = vector.broadcast %cst_106 : f32 to vector<16x1xf32>
    %276 = arith.addf %274, %275 : vector<16x1xf32>
    %277 = math.rsqrt %276 : vector<16x1xf32>
    %278 = vector.broadcast %277 : vector<16x1xf32> to vector<16x32xf32>
    %279 = arith.mulf %267, %278 : vector<16x32xf32>
    %280 = vector.broadcast %269 : vector<1x32xf32> to vector<16x32xf32>
    %281 = arith.mulf %279, %280 : vector<16x32xf32>
    %282 = arith.truncf %281 : vector<16x32xf32> to vector<16x32xbf16>
    %c0_107 = arith.constant 0 : index
    %c0_108 = arith.constant 0 : index
    %c0_109 = arith.constant 0 : index
    %283 = vector.load %arg8[%c0_107, %c0_108, %c0_109] : memref<2x32x64xbf16, #tpu.memory_space<vmem>>, vector<1x32x64xbf16>
    %284 = vector.shape_cast %283 : vector<1x32x64xbf16> to vector<32x64xbf16>
    %cst_110 = arith.constant dense<0.000000e+00> : vector<16x64xf32>
    %285 = tpu.matmul %282, %284, %cst_110 {dimension_numbers = #tpu.dot_dimension_numbers<[1], [0], [0], [1], [0, 0, 1, 1], [], []>} : vector<16x32xbf16>, vector<32x64xbf16>, vector<16x64xf32> -> vector<16x64xf32>
    %cst_111 = arith.constant 0.000000e+00 : f32
    %286 = vector.broadcast %cst_111 : f32 to vector<16x64xf32>
    %287 = arith.maximumf %285, %286 : vector<16x64xf32>
    %288 = arith.truncf %287 : vector<16x64xf32> to vector<16x64xbf16>
    %c0_112 = arith.constant 0 : index
    %c0_113 = arith.constant 0 : index
    %c0_114 = arith.constant 0 : index
    %289 = vector.load %arg9[%c0_112, %c0_113, %c0_114] : memref<2x64x32xbf16, #tpu.memory_space<vmem>>, vector<1x64x32xbf16>
    %290 = vector.shape_cast %289 : vector<1x64x32xbf16> to vector<64x32xbf16>
    %cst_115 = arith.constant dense<0.000000e+00> : vector<16x32xf32>
    %291 = tpu.matmul %288, %290, %cst_115 {dimension_numbers = #tpu.dot_dimension_numbers<[1], [0], [0], [1], [0, 0, 1, 1], [], []>} : vector<16x64xbf16>, vector<64x32xbf16>, vector<16x32xf32> -> vector<16x32xf32>
    %292 = arith.addf %267, %291 : vector<16x32xf32>
    %c1_116 = arith.constant 1 : index
    %c0_117 = arith.constant 0 : index
    %c0_118 = arith.constant 0 : index
    %293 = vector.load %arg4[%c1_116, %c0_117, %c0_118] : memref<2x1x32xf32, #tpu.memory_space<vmem>>, vector<1x1x32xf32>
    %294 = vector.shape_cast %293 : vector<1x1x32xf32> to vector<1x32xf32>
    %295 = arith.mulf %292, %292 : vector<16x32xf32>
    %cst_119 = arith.constant dense<0.000000e+00> : vector<16xf32>
    %296 = vector.multi_reduction <add>, %295, %cst_119 [1] : vector<16x32xf32> to vector<16xf32>
    %297 = vector.shape_cast %296 : vector<16xf32> to vector<16x1xf32>
    %cst_120 = arith.constant 3.200000e+01 : f32
    %298 = vector.broadcast %cst_120 : f32 to vector<16x1xf32>
    %299 = arith.divf %297, %298 : vector<16x1xf32>
    %cst_121 = arith.constant 9.99999997E-7 : f32
    %300 = vector.broadcast %cst_121 : f32 to vector<16x1xf32>
    %301 = arith.addf %299, %300 : vector<16x1xf32>
    %302 = math.rsqrt %301 : vector<16x1xf32>
    %303 = vector.broadcast %302 : vector<16x1xf32> to vector<16x32xf32>
    %304 = arith.mulf %292, %303 : vector<16x32xf32>
    %305 = vector.broadcast %294 : vector<1x32xf32> to vector<16x32xf32>
    %306 = arith.mulf %304, %305 : vector<16x32xf32>
    %307 = arith.truncf %306 : vector<16x32xf32> to vector<16x32xbf16>
    %c1_122 = arith.constant 1 : index
    %c0_123 = arith.constant 0 : index
    %c0_124 = arith.constant 0 : index
    %308 = vector.load %arg5[%c1_122, %c0_123, %c0_124] : memref<2x32x96xbf16, #tpu.memory_space<vmem>>, vector<1x32x96xbf16>
    %309 = vector.shape_cast %308 : vector<1x32x96xbf16> to vector<32x96xbf16>
    %cst_125 = arith.constant dense<0.000000e+00> : vector<16x96xf32>
    %310 = tpu.matmul %307, %309, %cst_125 {dimension_numbers = #tpu.dot_dimension_numbers<[1], [0], [0], [1], [0, 0, 1, 1], [], []>} : vector<16x32xbf16>, vector<32x96xbf16>, vector<16x96xf32> -> vector<16x96xf32>
    %c1_126 = arith.constant 1 : index
    %c0_127 = arith.constant 0 : index
    %c0_128 = arith.constant 0 : index
    %311 = vector.load %arg6[%c1_126, %c0_127, %c0_128] : memref<2x32x32xbf16, #tpu.memory_space<vmem>>, vector<1x32x32xbf16>
    %312 = vector.shape_cast %311 : vector<1x32x32xbf16> to vector<32x32xbf16>
    %313 = vector.extract_strided_slice %310 {offsets = [0, 0], sizes = [8, 96], strides = [1, 1]} : vector<16x96xf32> to vector<8x96xf32>
    %cst_129 = arith.constant 0.000000e+00 : f32
    %314 = vector.broadcast %cst_129 : f32 to vector<8x32xf32>
    %315 = vector.extract_strided_slice %313 {offsets = [0, 0], sizes = [8, 8], strides = [1, 1]} : vector<8x96xf32> to vector<8x8xf32>
    %316 = arith.truncf %315 : vector<8x8xf32> to vector<8x8xbf16>
    %317 = vector.extract_strided_slice %313 {offsets = [0, 32], sizes = [8, 8], strides = [1, 1]} : vector<8x96xf32> to vector<8x8xf32>
    %318 = arith.truncf %317 : vector<8x8xf32> to vector<8x8xbf16>
    %319 = vector.extract_strided_slice %313 {offsets = [0, 64], sizes = [8, 8], strides = [1, 1]} : vector<8x96xf32> to vector<8x8xf32>
    %320 = arith.truncf %319 : vector<8x8xf32> to vector<8x8xbf16>
    %cst_130 = arith.constant dense<0.000000e+00> : vector<8x8xf32>
    %321 = tpu.matmul %316, %318, %cst_130 {dimension_numbers = #tpu.dot_dimension_numbers<[1], [1], [0], [0], [0, 0, 1, 0], [], []>} : vector<8x8xbf16>, vector<8x8xbf16>, vector<8x8xf32> -> vector<8x8xf32>
    %322 = arith.addf %321, %7 : vector<8x8xf32>
    %cst_131 = arith.constant dense<0xFF800000> : vector<8xf32>
    %323 = vector.multi_reduction <maximumf>, %322, %cst_131 [1] : vector<8x8xf32> to vector<8xf32>
    %324 = vector.shape_cast %323 : vector<8xf32> to vector<8x1xf32>
    %325 = vector.broadcast %324 : vector<8x1xf32> to vector<8x8xf32>
    %326 = arith.subf %322, %325 : vector<8x8xf32>
    %327 = math.exp %326 : vector<8x8xf32>
    %cst_132 = arith.constant dense<0.000000e+00> : vector<8xf32>
    %328 = vector.multi_reduction <add>, %327, %cst_132 [1] : vector<8x8xf32> to vector<8xf32>
    %329 = vector.shape_cast %328 : vector<8xf32> to vector<8x1xf32>
    %330 = tpu.reciprocal %329 {approx = true} : vector<8x1xf32> -> vector<8x1xf32>
    %331 = vector.broadcast %330 : vector<8x1xf32> to vector<8x8xf32>
    %332 = arith.mulf %327, %331 : vector<8x8xf32>
    %333 = arith.truncf %332 : vector<8x8xf32> to vector<8x8xbf16>
    %cst_133 = arith.constant dense<0.000000e+00> : vector<8x8xf32>
    %334 = tpu.matmul %333, %320, %cst_133 {dimension_numbers = #tpu.dot_dimension_numbers<[1], [0], [0], [1], [0, 0, 1, 1], [], []>} : vector<8x8xbf16>, vector<8x8xbf16>, vector<8x8xf32> -> vector<8x8xf32>
    %335 = arith.truncf %334 : vector<8x8xf32> to vector<8x8xbf16>
    %336 = vector.extract_strided_slice %312 {offsets = [0, 0], sizes = [8, 32], strides = [1, 1]} : vector<32x32xbf16> to vector<8x32xbf16>
    %cst_134 = arith.constant dense<0.000000e+00> : vector<8x32xf32>
    %337 = tpu.matmul %335, %336, %cst_134 {dimension_numbers = #tpu.dot_dimension_numbers<[1], [0], [0], [1], [0, 0, 1, 1], [], []>} : vector<8x8xbf16>, vector<8x32xbf16>, vector<8x32xf32> -> vector<8x32xf32>
    %338 = arith.addf %314, %337 : vector<8x32xf32>
    %339 = vector.extract_strided_slice %313 {offsets = [0, 8], sizes = [8, 8], strides = [1, 1]} : vector<8x96xf32> to vector<8x8xf32>
    %340 = arith.truncf %339 : vector<8x8xf32> to vector<8x8xbf16>
    %341 = vector.extract_strided_slice %313 {offsets = [0, 40], sizes = [8, 8], strides = [1, 1]} : vector<8x96xf32> to vector<8x8xf32>
    %342 = arith.truncf %341 : vector<8x8xf32> to vector<8x8xbf16>
    %343 = vector.extract_strided_slice %313 {offsets = [0, 72], sizes = [8, 8], strides = [1, 1]} : vector<8x96xf32> to vector<8x8xf32>
    %344 = arith.truncf %343 : vector<8x8xf32> to vector<8x8xbf16>
    %cst_135 = arith.constant dense<0.000000e+00> : vector<8x8xf32>
    %345 = tpu.matmul %340, %342, %cst_135 {dimension_numbers = #tpu.dot_dimension_numbers<[1], [1], [0], [0], [0, 0, 1, 0], [], []>} : vector<8x8xbf16>, vector<8x8xbf16>, vector<8x8xf32> -> vector<8x8xf32>
    %346 = arith.addf %345, %13 : vector<8x8xf32>
    %cst_136 = arith.constant dense<0xFF800000> : vector<8xf32>
    %347 = vector.multi_reduction <maximumf>, %346, %cst_136 [1] : vector<8x8xf32> to vector<8xf32>
    %348 = vector.shape_cast %347 : vector<8xf32> to vector<8x1xf32>
    %349 = vector.broadcast %348 : vector<8x1xf32> to vector<8x8xf32>
    %350 = arith.subf %346, %349 : vector<8x8xf32>
    %351 = math.exp %350 : vector<8x8xf32>
    %cst_137 = arith.constant dense<0.000000e+00> : vector<8xf32>
    %352 = vector.multi_reduction <add>, %351, %cst_137 [1] : vector<8x8xf32> to vector<8xf32>
    %353 = vector.shape_cast %352 : vector<8xf32> to vector<8x1xf32>
    %354 = tpu.reciprocal %353 {approx = true} : vector<8x1xf32> -> vector<8x1xf32>
    %355 = vector.broadcast %354 : vector<8x1xf32> to vector<8x8xf32>
    %356 = arith.mulf %351, %355 : vector<8x8xf32>
    %357 = arith.truncf %356 : vector<8x8xf32> to vector<8x8xbf16>
    %cst_138 = arith.constant dense<0.000000e+00> : vector<8x8xf32>
    %358 = tpu.matmul %357, %344, %cst_138 {dimension_numbers = #tpu.dot_dimension_numbers<[1], [0], [0], [1], [0, 0, 1, 1], [], []>} : vector<8x8xbf16>, vector<8x8xbf16>, vector<8x8xf32> -> vector<8x8xf32>
    %359 = arith.truncf %358 : vector<8x8xf32> to vector<8x8xbf16>
    %360 = vector.extract_strided_slice %312 {offsets = [8, 0], sizes = [8, 32], strides = [1, 1]} : vector<32x32xbf16> to vector<8x32xbf16>
    %cst_139 = arith.constant dense<0.000000e+00> : vector<8x32xf32>
    %361 = tpu.matmul %359, %360, %cst_139 {dimension_numbers = #tpu.dot_dimension_numbers<[1], [0], [0], [1], [0, 0, 1, 1], [], []>} : vector<8x8xbf16>, vector<8x32xbf16>, vector<8x32xf32> -> vector<8x32xf32>
    %362 = arith.addf %338, %361 : vector<8x32xf32>
    %363 = vector.extract_strided_slice %313 {offsets = [0, 16], sizes = [8, 8], strides = [1, 1]} : vector<8x96xf32> to vector<8x8xf32>
    %364 = arith.truncf %363 : vector<8x8xf32> to vector<8x8xbf16>
    %365 = vector.extract_strided_slice %313 {offsets = [0, 48], sizes = [8, 8], strides = [1, 1]} : vector<8x96xf32> to vector<8x8xf32>
    %366 = arith.truncf %365 : vector<8x8xf32> to vector<8x8xbf16>
    %367 = vector.extract_strided_slice %313 {offsets = [0, 80], sizes = [8, 8], strides = [1, 1]} : vector<8x96xf32> to vector<8x8xf32>
    %368 = arith.truncf %367 : vector<8x8xf32> to vector<8x8xbf16>
    %cst_140 = arith.constant dense<0.000000e+00> : vector<8x8xf32>
    %369 = tpu.matmul %364, %366, %cst_140 {dimension_numbers = #tpu.dot_dimension_numbers<[1], [1], [0], [0], [0, 0, 1, 0], [], []>} : vector<8x8xbf16>, vector<8x8xbf16>, vector<8x8xf32> -> vector<8x8xf32>
    %370 = arith.addf %369, %19 : vector<8x8xf32>
    %cst_141 = arith.constant dense<0xFF800000> : vector<8xf32>
    %371 = vector.multi_reduction <maximumf>, %370, %cst_141 [1] : vector<8x8xf32> to vector<8xf32>
    %372 = vector.shape_cast %371 : vector<8xf32> to vector<8x1xf32>
    %373 = vector.broadcast %372 : vector<8x1xf32> to vector<8x8xf32>
    %374 = arith.subf %370, %373 : vector<8x8xf32>
    %375 = math.exp %374 : vector<8x8xf32>
    %cst_142 = arith.constant dense<0.000000e+00> : vector<8xf32>
    %376 = vector.multi_reduction <add>, %375, %cst_142 [1] : vector<8x8xf32> to vector<8xf32>
    %377 = vector.shape_cast %376 : vector<8xf32> to vector<8x1xf32>
    %378 = tpu.reciprocal %377 {approx = true} : vector<8x1xf32> -> vector<8x1xf32>
    %379 = vector.broadcast %378 : vector<8x1xf32> to vector<8x8xf32>
    %380 = arith.mulf %375, %379 : vector<8x8xf32>
    %381 = arith.truncf %380 : vector<8x8xf32> to vector<8x8xbf16>
    %cst_143 = arith.constant dense<0.000000e+00> : vector<8x8xf32>
    %382 = tpu.matmul %381, %368, %cst_143 {dimension_numbers = #tpu.dot_dimension_numbers<[1], [0], [0], [1], [0, 0, 1, 1], [], []>} : vector<8x8xbf16>, vector<8x8xbf16>, vector<8x8xf32> -> vector<8x8xf32>
    %383 = arith.truncf %382 : vector<8x8xf32> to vector<8x8xbf16>
    %384 = vector.extract_strided_slice %312 {offsets = [16, 0], sizes = [8, 32], strides = [1, 1]} : vector<32x32xbf16> to vector<8x32xbf16>
    %cst_144 = arith.constant dense<0.000000e+00> : vector<8x32xf32>
    %385 = tpu.matmul %383, %384, %cst_144 {dimension_numbers = #tpu.dot_dimension_numbers<[1], [0], [0], [1], [0, 0, 1, 1], [], []>} : vector<8x8xbf16>, vector<8x32xbf16>, vector<8x32xf32> -> vector<8x32xf32>
    %386 = arith.addf %362, %385 : vector<8x32xf32>
    %387 = vector.extract_strided_slice %313 {offsets = [0, 24], sizes = [8, 8], strides = [1, 1]} : vector<8x96xf32> to vector<8x8xf32>
    %388 = arith.truncf %387 : vector<8x8xf32> to vector<8x8xbf16>
    %389 = vector.extract_strided_slice %313 {offsets = [0, 56], sizes = [8, 8], strides = [1, 1]} : vector<8x96xf32> to vector<8x8xf32>
    %390 = arith.truncf %389 : vector<8x8xf32> to vector<8x8xbf16>
    %391 = vector.extract_strided_slice %313 {offsets = [0, 88], sizes = [8, 8], strides = [1, 1]} : vector<8x96xf32> to vector<8x8xf32>
    %392 = arith.truncf %391 : vector<8x8xf32> to vector<8x8xbf16>
    %cst_145 = arith.constant dense<0.000000e+00> : vector<8x8xf32>
    %393 = tpu.matmul %388, %390, %cst_145 {dimension_numbers = #tpu.dot_dimension_numbers<[1], [1], [0], [0], [0, 0, 1, 0], [], []>} : vector<8x8xbf16>, vector<8x8xbf16>, vector<8x8xf32> -> vector<8x8xf32>
    %394 = arith.addf %393, %25 : vector<8x8xf32>
    %cst_146 = arith.constant dense<0xFF800000> : vector<8xf32>
    %395 = vector.multi_reduction <maximumf>, %394, %cst_146 [1] : vector<8x8xf32> to vector<8xf32>
    %396 = vector.shape_cast %395 : vector<8xf32> to vector<8x1xf32>
    %397 = vector.broadcast %396 : vector<8x1xf32> to vector<8x8xf32>
    %398 = arith.subf %394, %397 : vector<8x8xf32>
    %399 = math.exp %398 : vector<8x8xf32>
    %cst_147 = arith.constant dense<0.000000e+00> : vector<8xf32>
    %400 = vector.multi_reduction <add>, %399, %cst_147 [1] : vector<8x8xf32> to vector<8xf32>
    %401 = vector.shape_cast %400 : vector<8xf32> to vector<8x1xf32>
    %402 = tpu.reciprocal %401 {approx = true} : vector<8x1xf32> -> vector<8x1xf32>
    %403 = vector.broadcast %402 : vector<8x1xf32> to vector<8x8xf32>
    %404 = arith.mulf %399, %403 : vector<8x8xf32>
    %405 = arith.truncf %404 : vector<8x8xf32> to vector<8x8xbf16>
    %cst_148 = arith.constant dense<0.000000e+00> : vector<8x8xf32>
    %406 = tpu.matmul %405, %392, %cst_148 {dimension_numbers = #tpu.dot_dimension_numbers<[1], [0], [0], [1], [0, 0, 1, 1], [], []>} : vector<8x8xbf16>, vector<8x8xbf16>, vector<8x8xf32> -> vector<8x8xf32>
    %407 = arith.truncf %406 : vector<8x8xf32> to vector<8x8xbf16>
    %408 = vector.extract_strided_slice %312 {offsets = [24, 0], sizes = [8, 32], strides = [1, 1]} : vector<32x32xbf16> to vector<8x32xbf16>
    %cst_149 = arith.constant dense<0.000000e+00> : vector<8x32xf32>
    %409 = tpu.matmul %407, %408, %cst_149 {dimension_numbers = #tpu.dot_dimension_numbers<[1], [0], [0], [1], [0, 0, 1, 1], [], []>} : vector<8x8xbf16>, vector<8x32xbf16>, vector<8x32xf32> -> vector<8x32xf32>
    %410 = arith.addf %386, %409 : vector<8x32xf32>
    %411 = vector.extract_strided_slice %310 {offsets = [8, 0], sizes = [8, 96], strides = [1, 1]} : vector<16x96xf32> to vector<8x96xf32>
    %cst_150 = arith.constant 0.000000e+00 : f32
    %412 = vector.broadcast %cst_150 : f32 to vector<8x32xf32>
    %413 = vector.extract_strided_slice %411 {offsets = [0, 0], sizes = [8, 8], strides = [1, 1]} : vector<8x96xf32> to vector<8x8xf32>
    %414 = arith.truncf %413 : vector<8x8xf32> to vector<8x8xbf16>
    %415 = vector.extract_strided_slice %411 {offsets = [0, 32], sizes = [8, 8], strides = [1, 1]} : vector<8x96xf32> to vector<8x8xf32>
    %416 = arith.truncf %415 : vector<8x8xf32> to vector<8x8xbf16>
    %417 = vector.extract_strided_slice %411 {offsets = [0, 64], sizes = [8, 8], strides = [1, 1]} : vector<8x96xf32> to vector<8x8xf32>
    %418 = arith.truncf %417 : vector<8x8xf32> to vector<8x8xbf16>
    %cst_151 = arith.constant dense<0.000000e+00> : vector<8x8xf32>
    %419 = tpu.matmul %414, %416, %cst_151 {dimension_numbers = #tpu.dot_dimension_numbers<[1], [1], [0], [0], [0, 0, 1, 0], [], []>} : vector<8x8xbf16>, vector<8x8xbf16>, vector<8x8xf32> -> vector<8x8xf32>
    %420 = arith.addf %419, %31 : vector<8x8xf32>
    %cst_152 = arith.constant dense<0xFF800000> : vector<8xf32>
    %421 = vector.multi_reduction <maximumf>, %420, %cst_152 [1] : vector<8x8xf32> to vector<8xf32>
    %422 = vector.shape_cast %421 : vector<8xf32> to vector<8x1xf32>
    %423 = vector.broadcast %422 : vector<8x1xf32> to vector<8x8xf32>
    %424 = arith.subf %420, %423 : vector<8x8xf32>
    %425 = math.exp %424 : vector<8x8xf32>
    %cst_153 = arith.constant dense<0.000000e+00> : vector<8xf32>
    %426 = vector.multi_reduction <add>, %425, %cst_153 [1] : vector<8x8xf32> to vector<8xf32>
    %427 = vector.shape_cast %426 : vector<8xf32> to vector<8x1xf32>
    %428 = tpu.reciprocal %427 {approx = true} : vector<8x1xf32> -> vector<8x1xf32>
    %429 = vector.broadcast %428 : vector<8x1xf32> to vector<8x8xf32>
    %430 = arith.mulf %425, %429 : vector<8x8xf32>
    %431 = arith.truncf %430 : vector<8x8xf32> to vector<8x8xbf16>
    %cst_154 = arith.constant dense<0.000000e+00> : vector<8x8xf32>
    %432 = tpu.matmul %431, %418, %cst_154 {dimension_numbers = #tpu.dot_dimension_numbers<[1], [0], [0], [1], [0, 0, 1, 1], [], []>} : vector<8x8xbf16>, vector<8x8xbf16>, vector<8x8xf32> -> vector<8x8xf32>
    %433 = arith.truncf %432 : vector<8x8xf32> to vector<8x8xbf16>
    %434 = vector.extract_strided_slice %312 {offsets = [0, 0], sizes = [8, 32], strides = [1, 1]} : vector<32x32xbf16> to vector<8x32xbf16>
    %cst_155 = arith.constant dense<0.000000e+00> : vector<8x32xf32>
    %435 = tpu.matmul %433, %434, %cst_155 {dimension_numbers = #tpu.dot_dimension_numbers<[1], [0], [0], [1], [0, 0, 1, 1], [], []>} : vector<8x8xbf16>, vector<8x32xbf16>, vector<8x32xf32> -> vector<8x32xf32>
    %436 = arith.addf %412, %435 : vector<8x32xf32>
    %437 = vector.extract_strided_slice %411 {offsets = [0, 8], sizes = [8, 8], strides = [1, 1]} : vector<8x96xf32> to vector<8x8xf32>
    %438 = arith.truncf %437 : vector<8x8xf32> to vector<8x8xbf16>
    %439 = vector.extract_strided_slice %411 {offsets = [0, 40], sizes = [8, 8], strides = [1, 1]} : vector<8x96xf32> to vector<8x8xf32>
    %440 = arith.truncf %439 : vector<8x8xf32> to vector<8x8xbf16>
    %441 = vector.extract_strided_slice %411 {offsets = [0, 72], sizes = [8, 8], strides = [1, 1]} : vector<8x96xf32> to vector<8x8xf32>
    %442 = arith.truncf %441 : vector<8x8xf32> to vector<8x8xbf16>
    %cst_156 = arith.constant dense<0.000000e+00> : vector<8x8xf32>
    %443 = tpu.matmul %438, %440, %cst_156 {dimension_numbers = #tpu.dot_dimension_numbers<[1], [1], [0], [0], [0, 0, 1, 0], [], []>} : vector<8x8xbf16>, vector<8x8xbf16>, vector<8x8xf32> -> vector<8x8xf32>
    %444 = arith.addf %443, %37 : vector<8x8xf32>
    %cst_157 = arith.constant dense<0xFF800000> : vector<8xf32>
    %445 = vector.multi_reduction <maximumf>, %444, %cst_157 [1] : vector<8x8xf32> to vector<8xf32>
    %446 = vector.shape_cast %445 : vector<8xf32> to vector<8x1xf32>
    %447 = vector.broadcast %446 : vector<8x1xf32> to vector<8x8xf32>
    %448 = arith.subf %444, %447 : vector<8x8xf32>
    %449 = math.exp %448 : vector<8x8xf32>
    %cst_158 = arith.constant dense<0.000000e+00> : vector<8xf32>
    %450 = vector.multi_reduction <add>, %449, %cst_158 [1] : vector<8x8xf32> to vector<8xf32>
    %451 = vector.shape_cast %450 : vector<8xf32> to vector<8x1xf32>
    %452 = tpu.reciprocal %451 {approx = true} : vector<8x1xf32> -> vector<8x1xf32>
    %453 = vector.broadcast %452 : vector<8x1xf32> to vector<8x8xf32>
    %454 = arith.mulf %449, %453 : vector<8x8xf32>
    %455 = arith.truncf %454 : vector<8x8xf32> to vector<8x8xbf16>
    %cst_159 = arith.constant dense<0.000000e+00> : vector<8x8xf32>
    %456 = tpu.matmul %455, %442, %cst_159 {dimension_numbers = #tpu.dot_dimension_numbers<[1], [0], [0], [1], [0, 0, 1, 1], [], []>} : vector<8x8xbf16>, vector<8x8xbf16>, vector<8x8xf32> -> vector<8x8xf32>
    %457 = arith.truncf %456 : vector<8x8xf32> to vector<8x8xbf16>
    %458 = vector.extract_strided_slice %312 {offsets = [8, 0], sizes = [8, 32], strides = [1, 1]} : vector<32x32xbf16> to vector<8x32xbf16>
    %cst_160 = arith.constant dense<0.000000e+00> : vector<8x32xf32>
    %459 = tpu.matmul %457, %458, %cst_160 {dimension_numbers = #tpu.dot_dimension_numbers<[1], [0], [0], [1], [0, 0, 1, 1], [], []>} : vector<8x8xbf16>, vector<8x32xbf16>, vector<8x32xf32> -> vector<8x32xf32>
    %460 = arith.addf %436, %459 : vector<8x32xf32>
    %461 = vector.extract_strided_slice %411 {offsets = [0, 16], sizes = [8, 8], strides = [1, 1]} : vector<8x96xf32> to vector<8x8xf32>
    %462 = arith.truncf %461 : vector<8x8xf32> to vector<8x8xbf16>
    %463 = vector.extract_strided_slice %411 {offsets = [0, 48], sizes = [8, 8], strides = [1, 1]} : vector<8x96xf32> to vector<8x8xf32>
    %464 = arith.truncf %463 : vector<8x8xf32> to vector<8x8xbf16>
    %465 = vector.extract_strided_slice %411 {offsets = [0, 80], sizes = [8, 8], strides = [1, 1]} : vector<8x96xf32> to vector<8x8xf32>
    %466 = arith.truncf %465 : vector<8x8xf32> to vector<8x8xbf16>
    %cst_161 = arith.constant dense<0.000000e+00> : vector<8x8xf32>
    %467 = tpu.matmul %462, %464, %cst_161 {dimension_numbers = #tpu.dot_dimension_numbers<[1], [1], [0], [0], [0, 0, 1, 0], [], []>} : vector<8x8xbf16>, vector<8x8xbf16>, vector<8x8xf32> -> vector<8x8xf32>
    %468 = arith.addf %467, %43 : vector<8x8xf32>
    %cst_162 = arith.constant dense<0xFF800000> : vector<8xf32>
    %469 = vector.multi_reduction <maximumf>, %468, %cst_162 [1] : vector<8x8xf32> to vector<8xf32>
    %470 = vector.shape_cast %469 : vector<8xf32> to vector<8x1xf32>
    %471 = vector.broadcast %470 : vector<8x1xf32> to vector<8x8xf32>
    %472 = arith.subf %468, %471 : vector<8x8xf32>
    %473 = math.exp %472 : vector<8x8xf32>
    %cst_163 = arith.constant dense<0.000000e+00> : vector<8xf32>
    %474 = vector.multi_reduction <add>, %473, %cst_163 [1] : vector<8x8xf32> to vector<8xf32>
    %475 = vector.shape_cast %474 : vector<8xf32> to vector<8x1xf32>
    %476 = tpu.reciprocal %475 {approx = true} : vector<8x1xf32> -> vector<8x1xf32>
    %477 = vector.broadcast %476 : vector<8x1xf32> to vector<8x8xf32>
    %478 = arith.mulf %473, %477 : vector<8x8xf32>
    %479 = arith.truncf %478 : vector<8x8xf32> to vector<8x8xbf16>
    %cst_164 = arith.constant dense<0.000000e+00> : vector<8x8xf32>
    %480 = tpu.matmul %479, %466, %cst_164 {dimension_numbers = #tpu.dot_dimension_numbers<[1], [0], [0], [1], [0, 0, 1, 1], [], []>} : vector<8x8xbf16>, vector<8x8xbf16>, vector<8x8xf32> -> vector<8x8xf32>
    %481 = arith.truncf %480 : vector<8x8xf32> to vector<8x8xbf16>
    %482 = vector.extract_strided_slice %312 {offsets = [16, 0], sizes = [8, 32], strides = [1, 1]} : vector<32x32xbf16> to vector<8x32xbf16>
    %cst_165 = arith.constant dense<0.000000e+00> : vector<8x32xf32>
    %483 = tpu.matmul %481, %482, %cst_165 {dimension_numbers = #tpu.dot_dimension_numbers<[1], [0], [0], [1], [0, 0, 1, 1], [], []>} : vector<8x8xbf16>, vector<8x32xbf16>, vector<8x32xf32> -> vector<8x32xf32>
    %484 = arith.addf %460, %483 : vector<8x32xf32>
    %485 = vector.extract_strided_slice %411 {offsets = [0, 24], sizes = [8, 8], strides = [1, 1]} : vector<8x96xf32> to vector<8x8xf32>
    %486 = arith.truncf %485 : vector<8x8xf32> to vector<8x8xbf16>
    %487 = vector.extract_strided_slice %411 {offsets = [0, 56], sizes = [8, 8], strides = [1, 1]} : vector<8x96xf32> to vector<8x8xf32>
    %488 = arith.truncf %487 : vector<8x8xf32> to vector<8x8xbf16>
    %489 = vector.extract_strided_slice %411 {offsets = [0, 88], sizes = [8, 8], strides = [1, 1]} : vector<8x96xf32> to vector<8x8xf32>
    %490 = arith.truncf %489 : vector<8x8xf32> to vector<8x8xbf16>
    %cst_166 = arith.constant dense<0.000000e+00> : vector<8x8xf32>
    %491 = tpu.matmul %486, %488, %cst_166 {dimension_numbers = #tpu.dot_dimension_numbers<[1], [1], [0], [0], [0, 0, 1, 0], [], []>} : vector<8x8xbf16>, vector<8x8xbf16>, vector<8x8xf32> -> vector<8x8xf32>
    %492 = arith.addf %491, %49 : vector<8x8xf32>
    %cst_167 = arith.constant dense<0xFF800000> : vector<8xf32>
    %493 = vector.multi_reduction <maximumf>, %492, %cst_167 [1] : vector<8x8xf32> to vector<8xf32>
    %494 = vector.shape_cast %493 : vector<8xf32> to vector<8x1xf32>
    %495 = vector.broadcast %494 : vector<8x1xf32> to vector<8x8xf32>
    %496 = arith.subf %492, %495 : vector<8x8xf32>
    %497 = math.exp %496 : vector<8x8xf32>
    %cst_168 = arith.constant dense<0.000000e+00> : vector<8xf32>
    %498 = vector.multi_reduction <add>, %497, %cst_168 [1] : vector<8x8xf32> to vector<8xf32>
    %499 = vector.shape_cast %498 : vector<8xf32> to vector<8x1xf32>
    %500 = tpu.reciprocal %499 {approx = true} : vector<8x1xf32> -> vector<8x1xf32>
    %501 = vector.broadcast %500 : vector<8x1xf32> to vector<8x8xf32>
    %502 = arith.mulf %497, %501 : vector<8x8xf32>
    %503 = arith.truncf %502 : vector<8x8xf32> to vector<8x8xbf16>
    %cst_169 = arith.constant dense<0.000000e+00> : vector<8x8xf32>
    %504 = tpu.matmul %503, %490, %cst_169 {dimension_numbers = #tpu.dot_dimension_numbers<[1], [0], [0], [1], [0, 0, 1, 1], [], []>} : vector<8x8xbf16>, vector<8x8xbf16>, vector<8x8xf32> -> vector<8x8xf32>
    %505 = arith.truncf %504 : vector<8x8xf32> to vector<8x8xbf16>
    %506 = vector.extract_strided_slice %312 {offsets = [24, 0], sizes = [8, 32], strides = [1, 1]} : vector<32x32xbf16> to vector<8x32xbf16>
    %cst_170 = arith.constant dense<0.000000e+00> : vector<8x32xf32>
    %507 = tpu.matmul %505, %506, %cst_170 {dimension_numbers = #tpu.dot_dimension_numbers<[1], [0], [0], [1], [0, 0, 1, 1], [], []>} : vector<8x8xbf16>, vector<8x32xbf16>, vector<8x32xf32> -> vector<8x32xf32>
    %508 = arith.addf %484, %507 : vector<8x32xf32>
    %509 = tpu.concatenate %410, %508 in 0 : vector<8x32xf32>, vector<8x32xf32> -> vector<16x32xf32>
    %510 = arith.addf %292, %509 : vector<16x32xf32>
    %c1_171 = arith.constant 1 : index
    %c0_172 = arith.constant 0 : index
    %c0_173 = arith.constant 0 : index
    %511 = vector.load %arg7[%c1_171, %c0_172, %c0_173] : memref<2x1x32xf32, #tpu.memory_space<vmem>>, vector<1x1x32xf32>
    %512 = vector.shape_cast %511 : vector<1x1x32xf32> to vector<1x32xf32>
    %513 = arith.mulf %510, %510 : vector<16x32xf32>
    %cst_174 = arith.constant dense<0.000000e+00> : vector<16xf32>
    %514 = vector.multi_reduction <add>, %513, %cst_174 [1] : vector<16x32xf32> to vector<16xf32>
    %515 = vector.shape_cast %514 : vector<16xf32> to vector<16x1xf32>
    %cst_175 = arith.constant 3.200000e+01 : f32
    %516 = vector.broadcast %cst_175 : f32 to vector<16x1xf32>
    %517 = arith.divf %515, %516 : vector<16x1xf32>
    %cst_176 = arith.constant 9.99999997E-7 : f32
    %518 = vector.broadcast %cst_176 : f32 to vector<16x1xf32>
    %519 = arith.addf %517, %518 : vector<16x1xf32>
    %520 = math.rsqrt %519 : vector<16x1xf32>
    %521 = vector.broadcast %520 : vector<16x1xf32> to vector<16x32xf32>
    %522 = arith.mulf %510, %521 : vector<16x32xf32>
    %523 = vector.broadcast %512 : vector<1x32xf32> to vector<16x32xf32>
    %524 = arith.mulf %522, %523 : vector<16x32xf32>
    %525 = arith.truncf %524 : vector<16x32xf32> to vector<16x32xbf16>
    %c1_177 = arith.constant 1 : index
    %c0_178 = arith.constant 0 : index
    %c0_179 = arith.constant 0 : index
    %526 = vector.load %arg8[%c1_177, %c0_178, %c0_179] : memref<2x32x64xbf16, #tpu.memory_space<vmem>>, vector<1x32x64xbf16>
    %527 = vector.shape_cast %526 : vector<1x32x64xbf16> to vector<32x64xbf16>
    %cst_180 = arith.constant dense<0.000000e+00> : vector<16x64xf32>
    %528 = tpu.matmul %525, %527, %cst_180 {dimension_numbers = #tpu.dot_dimension_numbers<[1], [0], [0], [1], [0, 0, 1, 1], [], []>} : vector<16x32xbf16>, vector<32x64xbf16>, vector<16x64xf32> -> vector<16x64xf32>
    %cst_181 = arith.constant 0.000000e+00 : f32
    %529 = vector.broadcast %cst_181 : f32 to vector<16x64xf32>
    %530 = arith.maximumf %528, %529 : vector<16x64xf32>
    %531 = arith.truncf %530 : vector<16x64xf32> to vector<16x64xbf16>
    %c1_182 = arith.constant 1 : index
    %c0_183 = arith.constant 0 : index
    %c0_184 = arith.constant 0 : index
    %532 = vector.load %arg9[%c1_182, %c0_183, %c0_184] : memref<2x64x32xbf16, #tpu.memory_space<vmem>>, vector<1x64x32xbf16>
    %533 = vector.shape_cast %532 : vector<1x64x32xbf16> to vector<64x32xbf16>
    %cst_185 = arith.constant dense<0.000000e+00> : vector<16x32xf32>
    %534 = tpu.matmul %531, %533, %cst_185 {dimension_numbers = #tpu.dot_dimension_numbers<[1], [0], [0], [1], [0, 0, 1, 1], [], []>} : vector<16x64xbf16>, vector<64x32xbf16>, vector<16x32xf32> -> vector<16x32xf32>
    %535 = arith.addf %510, %534 : vector<16x32xf32>
    %536 = vector.extract_strided_slice %535 {offsets = [0, 0], sizes = [1, 32], strides = [1, 1]} : vector<16x32xf32> to vector<1x32xf32>
    %537 = vector.extract_strided_slice %535 {offsets = [8, 0], sizes = [1, 32], strides = [1, 1]} : vector<16x32xf32> to vector<1x32xf32>
    %538 = tpu.concatenate %536, %537 in 0 : vector<1x32xf32>, vector<1x32xf32> -> vector<2x32xf32>
    %c0_186 = arith.constant 0 : index
    %c0_187 = arith.constant 0 : index
    %539 = vector.load %arg10[%c0_186, %c0_187] : memref<1x32xf32, #tpu.memory_space<vmem>>, vector<1x32xf32>
    %540 = arith.mulf %538, %538 : vector<2x32xf32>
    %cst_188 = arith.constant dense<0.000000e+00> : vector<2xf32>
    %541 = vector.multi_reduction <add>, %540, %cst_188 [1] : vector<2x32xf32> to vector<2xf32>
    %542 = vector.shape_cast %541 : vector<2xf32> to vector<2x1xf32>
    %cst_189 = arith.constant 3.200000e+01 : f32
    %543 = vector.broadcast %cst_189 : f32 to vector<2x1xf32>
    %544 = arith.divf %542, %543 : vector<2x1xf32>
    %cst_190 = arith.constant 9.99999997E-7 : f32
    %545 = vector.broadcast %cst_190 : f32 to vector<2x1xf32>
    %546 = arith.addf %544, %545 : vector<2x1xf32>
    %547 = math.rsqrt %546 : vector<2x1xf32>
    %548 = vector.broadcast %547 : vector<2x1xf32> to vector<2x32xf32>
    %549 = arith.mulf %538, %548 : vector<2x32xf32>
    %550 = vector.broadcast %539 : vector<1x32xf32> to vector<2x32xf32>
    %551 = arith.mulf %549, %550 : vector<2x32xf32>
    %552 = arith.truncf %551 : vector<2x32xf32> to vector<2x32xbf16>
    %c0_191 = arith.constant 0 : index
    %c0_192 = arith.constant 0 : index
    %553 = vector.load %arg11[%c0_191, %c0_192] : memref<32x2xbf16, #tpu.memory_space<vmem>>, vector<32x2xbf16>
    %cst_193 = arith.constant dense<0.000000e+00> : vector<2x2xf32>
    %554 = tpu.matmul %552, %553, %cst_193 {dimension_numbers = #tpu.dot_dimension_numbers<[1], [0], [0], [1], [0, 0, 1, 1], [], []>} : vector<2x32xbf16>, vector<32x2xbf16>, vector<2x2xf32> -> vector<2x2xf32>
    %c0_194 = arith.constant 0 : index
    %c0_195 = arith.constant 0 : index
    %555 = vector.load %arg12[%c0_194, %c0_195] : memref<1x2xf32, #tpu.memory_space<vmem>>, vector<1x2xf32>
    %556 = vector.broadcast %555 : vector<1x2xf32> to vector<2x2xf32>
    %557 = arith.addf %554, %556 : vector<2x2xf32>
    %c0_196 = arith.constant 0 : index
    %c0_197 = arith.constant 0 : index
    %558 = vector.load %arg13[%c0_196, %c0_197] : memref<2x2xf32, #tpu.memory_space<vmem>>, vector<2x2xf32>
    tpu.vector_store %arg13[%c0_196, %c0_197], %557 {strides = array<i32>} : memref<2x2xf32, #tpu.memory_space<vmem>>, vector<2x2xf32>,
    return
  }
  func.func @transform_0(%arg0: i32) -> (i32, i32, i32) {
    %c0_i32 = arith.constant 0 : i32
    %c0_i32_0 = arith.constant 0 : i32
    %c0_i32_1 = arith.constant 0 : i32
    %c0_i32_2 = arith.constant 0 : i32
    return %c0_i32, %c0_i32_0, %c0_i32_1 : i32, i32, i32
  }
  func.func @transform_1(%arg0: i32) -> (i32, i32, i32) {
    %c0_i32 = arith.constant 0 : i32
    %c0_i32_0 = arith.constant 0 : i32
    %c0_i32_1 = arith.constant 0 : i32
    %c0_i32_2 = arith.constant 0 : i32
    return %c0_i32, %c0_i32_0, %c0_i32_1 : i32, i32, i32
  }
  func.func @transform_2(%arg0: i32) -> (i32, i32, i32) {
    %c0_i32 = arith.constant 0 : i32
    %c0_i32_0 = arith.constant 0 : i32
    %c0_i32_1 = arith.constant 0 : i32
    %c0_i32_2 = arith.constant 0 : i32
    return %c0_i32, %c0_i32_0, %c0_i32_1 : i32, i32, i32
  }
  func.func @transform_3(%arg0: i32) -> (i32, i32, i32) {
    %c0_i32 = arith.constant 0 : i32
    %c0_i32_0 = arith.constant 0 : i32
    %c0_i32_1 = arith.constant 0 : i32
    %c0_i32_2 = arith.constant 0 : i32
    return %c0_i32, %c0_i32_0, %c0_i32_1 : i32, i32, i32
  }
  func.func @transform_4(%arg0: i32) -> (i32, i32, i32) {
    %c0_i32 = arith.constant 0 : i32
    %c0_i32_0 = arith.constant 0 : i32
    %c0_i32_1 = arith.constant 0 : i32
    %c0_i32_2 = arith.constant 0 : i32
    return %c0_i32, %c0_i32_0, %c0_i32_1 : i32, i32, i32
  }
  func.func @transform_5(%arg0: i32) -> (i32, i32, i32) {
    %c0_i32 = arith.constant 0 : i32
    %c0_i32_0 = arith.constant 0 : i32
    %c0_i32_1 = arith.constant 0 : i32
    %c0_i32_2 = arith.constant 0 : i32
    return %c0_i32, %c0_i32_0, %c0_i32_1 : i32, i32, i32
  }
  func.func @transform_6(%arg0: i32) -> (i32, i32, i32) {
    %c0_i32 = arith.constant 0 : i32
    %c0_i32_0 = arith.constant 0 : i32
    %c0_i32_1 = arith.constant 0 : i32
    %c0_i32_2 = arith.constant 0 : i32
    return %c0_i32, %c0_i32_0, %c0_i32_1 : i32, i32, i32
  }
  func.func @transform_7(%arg0: i32) -> (i32, i32, i32) {
    %c0_i32 = arith.constant 0 : i32
    %c0_i32_0 = arith.constant 0 : i32
    %c0_i32_1 = arith.constant 0 : i32
    %c0_i32_2 = arith.constant 0 : i32
    return %c0_i32, %c0_i32_0, %c0_i32_1 : i32, i32, i32
  }
  func.func @transform_8(%arg0: i32) -> (i32, i32, i32) {
    %c0_i32 = arith.constant 0 : i32
    %c0_i32_0 = arith.constant 0 : i32
    %c0_i32_1 = arith.constant 0 : i32
    %c0_i32_2 = arith.constant 0 : i32
    return %c0_i32, %c0_i32_0, %c0_i32_1 : i32, i32, i32
  }
  func.func @transform_9(%arg0: i32) -> (i32, i32) {
    %c0_i32 = arith.constant 0 : i32
    %c0_i32_0 = arith.constant 0 : i32
    %c0_i32_1 = arith.constant 0 : i32
    return %c0_i32, %c0_i32_0 : i32, i32
  }
  func.func @transform_10(%arg0: i32) -> (i32, i32) {
    %c0_i32 = arith.constant 0 : i32
    %c0_i32_0 = arith.constant 0 : i32
    %c0_i32_1 = arith.constant 0 : i32
    return %c0_i32, %c0_i32_0 : i32, i32
  }
  func.func @transform_11(%arg0: i32) -> (i32, i32) {
    %c0_i32 = arith.constant 0 : i32
    %c0_i32_0 = arith.constant 0 : i32
    %c0_i32_1 = arith.constant 0 : i32
    return %c0_i32, %c0_i32_0 : i32, i32
  }
  func.func @transform_12(%arg0: i32) -> (i32, i32) {
    %c0_i32 = arith.constant 0 : i32
    %c0_i32_0 = arith.constant 0 : i32
    %c0_i32_1 = arith.constant 0 : i32
    return %c0_i32, %c0_i32_0 : i32, i32
  }
}

</mosaic_0001>

<llo_original>
// kernel: discriminator_forward.1
$region0: #{discriminator_forward.1}
  #allocation0 [shape = 'u32[]', space=smem, size = 0x4, offset = 0x4, fixed_abs, tag = 'smem constant byte address 0x4 - core index']
  #allocation1 [shape = 'u32[72,128]{1,0:T(1,128)}', space=vmem, size = 0x9000, scoped, tag = 'internal scratch']
  %s0 = inlined_call_operand.vmem [shape: f32[2,8,32], index: 0, kind: input, shape index: {}]
  %s1 = inlined_call_operand.vmem [shape: f32[2,1,8], index: 1, kind: input, shape index: {}]
  %s2 = inlined_call_operand.vmem [shape: f32[4,8,8], index: 2, kind: input, shape index: {}]
  %s3 = inlined_call_operand.vmem [shape: f32[2,1,32], index: 3, kind: input, shape index: {}]
  %s4 = inlined_call_operand.vmem [shape: bf16[2,32,96], index: 4, kind: input, shape index: {}]
  %s5 = inlined_call_operand.vmem [shape: bf16[2,32,32], index: 5, kind: input, shape index: {}]
  %s6 = inlined_call_operand.vmem [shape: f32[2,1,32], index: 6, kind: input, shape index: {}]
  %s7 = inlined_call_operand.vmem [shape: bf16[2,32,64], index: 7, kind: input, shape index: {}]
  %s8 = inlined_call_operand.vmem [shape: bf16[2,64,32], index: 8, kind: input, shape index: {}]
  %s9 = inlined_call_operand.vmem [shape: f32[1,32], index: 9, kind: input, shape index: {}]
  %s10 = inlined_call_operand.vmem [shape: bf16[32,2], index: 10, kind: input, shape index: {}]
  %s11 = inlined_call_operand.vmem [shape: f32[1,2], index: 11, kind: input, shape index: {}]
  %s12 = inlined_call_operand.hbm [shape: f32[2,2], index: 12, kind: output, shape index: {}]
  %s13 = sld [smem:[#allocation0]]
  $region58: #{discriminator_forward.1} parent=0
    _
  %s15 = ssub.s32 1, %s13
  %s16 = scalar_select 0, %s15, %s13
  $region1: #{discriminator_forward.1} parent=0
    #allocation2 [shape = 'u8[1024]{0}', space=vmem, size = 0x400, scoped, tag = 'output window, operand 0, single buffered']
    #allocation3 [shape = 's32[1]{0}', space=sflag, size = 0x4, scoped, tag = 'scoped memory for discriminator_forward.1']
    %17 = vsyncpa [#allocation3], 0
    // Predicated region
    $region2: #{discriminator_forward.1} parent=1 // pred_check
      _
    $region3: #{discriminator_forward.1} parent=1 // pred_check_branch
      %19 = sbr.rel (0) target = $region5
    $region4: #{discriminator_forward.1} parent=1 // pred_region
      _
    $region5: #{discriminator_forward.1} parent=1 // pred_fallthru
      _
    // Predicated region
    $region6: #{discriminator_forward.1} parent=1 // pred_check
      _
    $region7: #{discriminator_forward.1} parent=1 // pred_check_branch
      %21 = sbr.rel (0) target = $region9
    $region8: #{discriminator_forward.1} parent=1 // pred_region
      _
    $region9: #{discriminator_forward.1} parent=1 // pred_fallthru
      _
    // Predicated region
    $region10: #{discriminator_forward.1} parent=1 // pred_check
      _
    $region11: #{discriminator_forward.1} parent=1 // pred_check_branch
      %23 = sbr.rel (0) target = $region13
    $region12: #{discriminator_forward.1} parent=1 // pred_region
      _
    $region13: #{discriminator_forward.1} parent=1 // pred_fallthru
      _
    // Predicated region
    $region14: #{discriminator_forward.1} parent=1 // pred_check
      _
    $region15: #{discriminator_forward.1} parent=1 // pred_check_branch
      %25 = sbr.rel (0) target = $region17
    $region16: #{discriminator_forward.1} parent=1 // pred_region
      _
    $region17: #{discriminator_forward.1} parent=1 // pred_fallthru
      _
    // Predicated region
    $region18: #{discriminator_forward.1} parent=1 // pred_check
      _
    $region19: #{discriminator_forward.1} parent=1 // pred_check_branch
      %27 = sbr.rel (0) target = $region21
    $region20: #{discriminator_forward.1} parent=1 // pred_region
      _
    $region21: #{discriminator_forward.1} parent=1 // pred_fallthru
      _
    // Predicated region
    $region22: #{discriminator_forward.1} parent=1 // pred_check
      _
    $region23: #{discriminator_forward.1} parent=1 // pred_check_branch
      %29 = sbr.rel (0) target = $region25
    $region24: #{discriminator_forward.1} parent=1 // pred_region
      _
    $region25: #{discriminator_forward.1} parent=1 // pred_fallthru
      _
    // Predicated region
    $region26: #{discriminator_forward.1} parent=1 // pred_check
      _
    $region27: #{discriminator_forward.1} parent=1 // pred_check_branch
      %31 = sbr.rel (0) target = $region29
    $region28: #{discriminator_forward.1} parent=1 // pred_region
      _
    $region29: #{discriminator_forward.1} parent=1 // pred_fallthru
      _
    // Predicated region
    $region30: #{discriminator_forward.1} parent=1 // pred_check
      _
    $region31: #{discriminator_forward.1} parent=1 // pred_check_branch
      %33 = sbr.rel (0) target = $region33
    $region32: #{discriminator_forward.1} parent=1 // pred_region
      _
    $region33: #{discriminator_forward.1} parent=1 // pred_fallthru
      _
    // Predicated region
    $region34: #{discriminator_forward.1} parent=1 // pred_check
      _
    $region35: #{discriminator_forward.1} parent=1 // pred_check_branch
      %35 = sbr.rel (0) target = $region37
    $region36: #{discriminator_forward.1} parent=1 // pred_region
      _
    $region37: #{discriminator_forward.1} parent=1 // pred_fallthru
      _
    // Predicated region
    $region38: #{discriminator_forward.1} parent=1 // pred_check
      _
    $region39: #{discriminator_forward.1} parent=1 // pred_check_branch
      %37 = sbr.rel (0) target = $region41
    $region40: #{discriminator_forward.1} parent=1 // pred_region
      _
    $region41: #{discriminator_forward.1} parent=1 // pred_fallthru
      _
    // Predicated region
    $region42: #{discriminator_forward.1} parent=1 // pred_check
      _
    $region43: #{discriminator_forward.1} parent=1 // pred_check_branch
      %39 = sbr.rel (0) target = $region45
    $region44: #{discriminator_forward.1} parent=1 // pred_region
      _
    $region45: #{discriminator_forward.1} parent=1 // pred_fallthru
      _
    // Predicated region
    $region46: #{discriminator_forward.1} parent=1 // pred_check
      _
    $region47: #{discriminator_forward.1} parent=1 // pred_check_branch
      %41 = sbr.rel (0) target = $region49
    $region48: #{discriminator_forward.1} parent=1 // pred_region
      _
    $region49: #{discriminator_forward.1} parent=1 // pred_fallthru
      _
    %v43 = vld [vmem:[%s0] sm:$0xff]
    %v44 = vld [vmem:[%s0 + $0x8] sm:$0xff]
    %v45 = vld [vmem:[%s2] sm:$0xff]
    %v46 = vld [vmem:[%s1] sm:$0x1]
    %v48 = vperm.slane %v46, 0
    %v50 = vadd.f32 %v45, %v48
    %s51 = scalar_lea.vmem %s2, 8
    %v52 = vld [vmem:[%s51] sm:$0xff]
    %v53 = vadd.f32 %v52, %v48
    %s54 = scalar_lea.vmem %s2, 16
    %v55 = vld [vmem:[%s54] sm:$0xff]
    %v56 = vadd.f32 %v55, %v48
    %s57 = scalar_lea.vmem %s2, 24
    %v58 = vld [vmem:[%s57] sm:$0xff]
    %v59 = vadd.f32 %v58, %v48
    %s60 = scalar_lea.vmem %s1, 1
    %v61 = vld [vmem:[%s60] sm:$0x1]
    %v63 = vperm.slane %v61, 0
    %v65 = vadd.f32 %v45, %v63
    %v66 = vadd.f32 %v52, %v63
    %v67 = vadd.f32 %v55, %v63
    %v68 = vadd.f32 %v58, %v63
    %v69 = vld [vmem:[%s3] sm:$0x1]
    %v70 = vmul.f32 %v43, %v43
    %v71 = vmul.f32 %v44, %v44
    %vm72 = vcmask 261120
    %v73 = vsel %vm72, %v70, 0.0
    %74 = vadd.xlane.f32.xlu0 %v73
    %v75 = vpop.xlane.xlu0 %74
    %v76 = vsel %vm72, %v71, 0.0
    %77 = vadd.xlane.f32.xlu0 %v76
    %v78 = vpop.xlane.xlu0 %77
    %v79 = vrcp.pop 32.0
    %v80 = vmul.f32 32.0, %v79
    %v81 = vsub.f32 1.0, %v80
    %v82 = vmul.f32 %v79, %v81
    %v83 = vadd.f32 %v79, %v82
    %vm84 = vweird.f32 %v79
    %v85 = vsel %vm84, %v79, %v83
    %v86 = vmul.f32 %v75, %v85
    %v87 = vmul.f32 %v78, %v85
    %v88 = vadd.f32 %v86, 1e-06
    %v89 = vadd.f32 %v87, 1e-06
    %v90 = vrsqrt.pop %v88
    %v91 = vmul.f32 %v90, %v88
    %v92 = vmul.f32 %v91, %v90
    %v93 = vmul.f32 0.5, %v92
    %v94 = vsub.f32 1.5, %v93
    %v95 = vmul.f32 %v90, %v94
    %vm96 = vweird.f32 %v88
    %vm97 = vweird.f32 %v90
    %vm98 = vmor %vm96, %vm97
    %v99 = vsel %vm98, %v90, %v95
    %v100 = vrsqrt.pop %v89
    %v101 = vmul.f32 %v100, %v89
    %v102 = vmul.f32 %v101, %v100
    %v103 = vmul.f32 0.5, %v102
    %v104 = vsub.f32 1.5, %v103
    %v105 = vmul.f32 %v100, %v104
    %vm106 = vweird.f32 %v89
    %vm107 = vweird.f32 %v100
    %vm108 = vmor %vm106, %vm107
    %v109 = vsel %vm108, %v100, %v105
    %v110 = vmul.f32 %v43, %v99
    %v111 = vmul.f32 %v44, %v109
    %v113 = vperm.slane %v69, 0
    %v115 = vmul.f32 %v110, %v113
    %v116 = vmul.f32 %v111, %v113
    %v117 = vpack.c.bf16 %v116, %v115
    %v118 = vld [vmem:[%s4] sm:$0xf]
    %v119 = vld [vmem:[%s4 + $0x4] sm:$0xf]
    %v120 = vld [vmem:[%s4 + $0x8] sm:$0xf]
    %v121 = vld [vmem:[%s4 + $0xc] sm:$0xf]
    %v126 = vunpack.c.l.b16 %v118
    %v127 = vunpack.c.l.b16 %v119
    %v128 = vunpack.c.l.b16 %v120
    %v129 = vunpack.c.l.b16 %v121
    %v130 = vpack.c.b16 %v127, %v126
    %v131 = vpack.c.b16 %v129, %v128
    %v135 = vsel %vm72, %v117, 0
    %137 = vmatpush.bf16.msra.mxu0 0
    %138 = vmatpush.bf16.msra.mxu0 0
    %139 = vmatpush.bf16.msra.mxu0 0
    %140 = vmatpush.bf16.msra.mxu0 0
    %141 = vmatpush.bf16.msra.mxu0 0
    %142 = vmatpush.bf16.msra.mxu0 0
    %143 = vmatpush.bf16.msra.mxu0 %v131
    %144 = vmatpush.bf16.msra.mxu0 %v130
    %145 = vmatmul.bf16.gmra.mxu0 %v135
    %v146 = vpop.f32.mrf.mxu0
    %v147 = vadd.f32 0.0, %v146
    %v148 = vpop.f32.mrf.mxu0
    %v149 = vadd.f32 0.0, %v148
    %150 = vdwg.mxu0
    %v151 = vld [vmem:[%s5] sm:$0xf]
    %v152 = vld [vmem:[%s5 + $0x4] sm:$0xf]
    %v153 = vld [vmem:[%s5 + $0x8] sm:$0xf]
    %v154 = vld [vmem:[%s5 + $0xc] sm:$0xf]
    %v155 = vpack.c.bf16 %v147, %v147
    %157 = vrot.lane.b32.xlu0 %v155, 96
    %v158 = vpop.permute.xlu0 %157
    %vm159 = vcmask 64512
    %v161 = vsel %vm159, %v155, 0
    %v164 = vsel %vm159, %v158, 0
    %166 = vmatpush.bf16.xpose.msra.mxu0 0
    %167 = vmatpush.bf16.xpose.msra.mxu0 0
    %168 = vmatpush.bf16.xpose.msra.mxu0 0
    %169 = vmatpush.bf16.xpose.msra.mxu0 0
    %170 = vmatpush.bf16.xpose.msra.mxu0 0
    %171 = vmatpush.bf16.xpose.msra.mxu0 0
    %172 = vmatpush.bf16.xpose.msra.mxu0 0
    %173 = vmatpush.bf16.xpose.msra.mxu0 %v164
    %174 = vmatmul.bf16.gmra.mxu0 %v161
    %v175 = vpop.f32.mrf.mxu0
    %v176 = vadd.f32 %v50, %v175
    %v177 = vpop.f32.mrf.mxu0
    %178 = vdwg.mxu0
    %v179 = vsel %vm159, %v176, -inf
    %180 = vmax.xlane.f32.xlu0 %v179
    %v181 = vpop.xlane.xlu0 %180
    %v182 = vsub.f32 %v176, %v181
    %v183 = vmul.f32 %v182, 1.442695
    %v184 = vpow.pop %v183
    %v185 = vsel %vm159, %v184, 0.0
    %186 = vadd.xlane.f32.xlu0 %v185
    %v187 = vpop.xlane.xlu0 %186
    %v188 = vrcp.pop %v187
    %v189 = vmul.f32 %v184, %v188
    %v190 = vpack.c.bf16 %v189, %v189
    %191 = vrot.lane.b32.xlu0 %v155, 64
    %v192 = vpop.permute.xlu0 %191
    %v194 = vsel %vm159, %v190, 0
    %vm196 = vcmask 1043456
    %v198 = vsel %vm196, %v192, 0
    %200 = vmatpush.bf16.msra.mxu0 0
    %201 = vmatpush.bf16.msra.mxu0 0
    %202 = vmatpush.bf16.msra.mxu0 0
    %203 = vmatpush.bf16.msra.mxu0 0
    %204 = vmatpush.bf16.msra.mxu0 0
    %205 = vmatpush.bf16.msra.mxu0 0
    %206 = vmatpush.bf16.msra.mxu0 0
    %207 = vmatpush.bf16.msra.mxu0 %v198
    %208 = vmatmul.bf16.gmra.mxu0 %v194
    %v209 = vpop.f32.mrf.mxu0
    %v210 = vadd.f32 0.0, %v209
    %v211 = vpop.f32.mrf.mxu0
    %212 = vdwg.mxu0
    %v213 = vpack.c.bf16 %v210, %v210
    %214 = vrot.lane.b32.xlu0 %v155, 120
    %v215 = vpop.permute.xlu0 %214
    %216 = vrot.lane.b32.xlu0 %v155, 88
    %v217 = vpop.permute.xlu0 %216
    %v219 = vsel %vm159, %v215, 0
    %v222 = vsel %vm159, %v217, 0
    %224 = vmatpush.bf16.xpose.msra.mxu0 0
    %225 = vmatpush.bf16.xpose.msra.mxu0 0
    %226 = vmatpush.bf16.xpose.msra.mxu0 0
    %227 = vmatpush.bf16.xpose.msra.mxu0 0
    %228 = vmatpush.bf16.xpose.msra.mxu0 0
    %229 = vmatpush.bf16.xpose.msra.mxu0 0
    %230 = vmatpush.bf16.xpose.msra.mxu0 0
    %231 = vmatpush.bf16.xpose.msra.mxu0 %v222
    %232 = vmatmul.bf16.gmra.mxu0 %v219
    %v233 = vpop.f32.mrf.mxu0
    %v234 = vadd.f32 %v53, %v233
    %v235 = vpop.f32.mrf.mxu0
    %236 = vdwg.mxu0
    %v237 = vsel %vm159, %v234, -inf
    %238 = vmax.xlane.f32.xlu0 %v237
    %v239 = vpop.xlane.xlu0 %238
    %v240 = vsub.f32 %v234, %v239
    %v241 = vmul.f32 %v240, 1.442695
    %v242 = vpow.pop %v241
    %v243 = vsel %vm159, %v242, 0.0
    %244 = vadd.xlane.f32.xlu0 %v243
    %v245 = vpop.xlane.xlu0 %244
    %v246 = vrcp.pop %v245
    %v247 = vmul.f32 %v242, %v246
    %v248 = vpack.c.bf16 %v247, %v247
    %249 = vrot.lane.b32.xlu0 %v155, 56
    %v250 = vpop.permute.xlu0 %249
    %v252 = vsel %vm159, %v248, 0
    %v255 = vsel %vm196, %v250, 0
    %257 = vmatpush.bf16.msra.mxu0 0
    %258 = vmatpush.bf16.msra.mxu0 0
    %259 = vmatpush.bf16.msra.mxu0 0
    %260 = vmatpush.bf16.msra.mxu0 0
    %261 = vmatpush.bf16.msra.mxu0 0
    %262 = vmatpush.bf16.msra.mxu0 0
    %263 = vmatpush.bf16.msra.mxu0 0
    %264 = vmatpush.bf16.msra.mxu0 %v255
    %265 = vmatmul.bf16.gmra.mxu0 %v252
    %v266 = vpop.f32.mrf.mxu0
    %v267 = vadd.f32 0.0, %v266
    %v268 = vpop.f32.mrf.mxu0
    %269 = vdwg.mxu0
    %v270 = vpack.c.bf16 %v267, %v267
    %v272 = vsel %vm159, %v270, 0
    %v275 = vsel %vm196, %v152, 0
    %277 = vmatpush.bf16.msra.mxu0 0
    %278 = vmatpush.bf16.msra.mxu0 0
    %279 = vmatpush.bf16.msra.mxu0 0
    %280 = vmatpush.bf16.msra.mxu0 0
    %281 = vmatpush.bf16.msra.mxu0 0
    %282 = vmatpush.bf16.msra.mxu0 0
    %283 = vmatpush.bf16.msra.mxu0 0
    %284 = vmatpush.bf16.msra.mxu0 %v275
    %285 = vmatmul.bf16.gmra.mxu0 %v272
    %v286 = vpop.f32.mrf.mxu0
    %v287 = vadd.f32 0.0, %v286
    %v288 = vpop.f32.mrf.mxu0
    %289 = vdwg.mxu0
    %v291 = vsel %vm159, %v213, 0
    %v294 = vsel %vm196, %v151, 0
    %296 = vmatpush.bf16.msra.mxu0 0
    %297 = vmatpush.bf16.msra.mxu0 0
    %298 = vmatpush.bf16.msra.mxu0 0
    %299 = vmatpush.bf16.msra.mxu0 0
    %300 = vmatpush.bf16.msra.mxu0 0
    %301 = vmatpush.bf16.msra.mxu0 0
    %302 = vmatpush.bf16.msra.mxu0 0
    %303 = vmatpush.bf16.msra.mxu0 %v294
    %304 = vmatmul.bf16.gmra.mxu0 %v291
    %v305 = vpop.f32.mrf.mxu0
    %v306 = vadd.f32 %v287, %v305
    %v307 = vpop.f32.mrf.mxu0
    %308 = vdwg.mxu0
    %309 = vrot.lane.b32.xlu0 %v155, 112
    %v310 = vpop.permute.xlu0 %309
    %311 = vrot.lane.b32.xlu0 %v155, 80
    %v312 = vpop.permute.xlu0 %311
    %v314 = vsel %vm159, %v310, 0
    %v317 = vsel %vm159, %v312, 0
    %319 = vmatpush.bf16.xpose.msra.mxu0 0
    %320 = vmatpush.bf16.xpose.msra.mxu0 0
    %321 = vmatpush.bf16.xpose.msra.mxu0 0
    %322 = vmatpush.bf16.xpose.msra.mxu0 0
    %323 = vmatpush.bf16.xpose.msra.mxu0 0
    %324 = vmatpush.bf16.xpose.msra.mxu0 0
    %325 = vmatpush.bf16.xpose.msra.mxu0 0
    %326 = vmatpush.bf16.xpose.msra.mxu0 %v317
    %327 = vmatmul.bf16.gmra.mxu0 %v314
    %v328 = vpop.f32.mrf.mxu0
    %v329 = vadd.f32 %v56, %v328
    %v330 = vpop.f32.mrf.mxu0
    %331 = vdwg.mxu0
    %v332 = vsel %vm159, %v329, -inf
    %333 = vmax.xlane.f32.xlu0 %v332
    %v334 = vpop.xlane.xlu0 %333
    %v335 = vsub.f32 %v329, %v334
    %v336 = vmul.f32 %v335, 1.442695
    %v337 = vpow.pop %v336
    %v338 = vsel %vm159, %v337, 0.0
    %339 = vadd.xlane.f32.xlu0 %v338
    %v340 = vpop.xlane.xlu0 %339
    %v341 = vrcp.pop %v340
    %v342 = vmul.f32 %v337, %v341
    %v343 = vpack.c.bf16 %v342, %v342
    %344 = vrot.lane.b32.xlu0 %v155, 48
    %v345 = vpop.permute.xlu0 %344
    %v347 = vsel %vm159, %v343, 0
    %v350 = vsel %vm196, %v345, 0
    %352 = vmatpush.bf16.msra.mxu0 0
    %353 = vmatpush.bf16.msra.mxu0 0
    %354 = vmatpush.bf16.msra.mxu0 0
    %355 = vmatpush.bf16.msra.mxu0 0
    %356 = vmatpush.bf16.msra.mxu0 0
    %357 = vmatpush.bf16.msra.mxu0 0
    %358 = vmatpush.bf16.msra.mxu0 0
    %359 = vmatpush.bf16.msra.mxu0 %v350
    %360 = vmatmul.bf16.gmra.mxu0 %v347
    %v361 = vpop.f32.mrf.mxu0
    %v362 = vadd.f32 0.0, %v361
    %v363 = vpop.f32.mrf.mxu0
    %364 = vdwg.mxu0
    %v365 = vpack.c.bf16 %v362, %v362
    %v367 = vsel %vm159, %v365, 0
    %v370 = vsel %vm196, %v153, 0
    %372 = vmatpush.bf16.msra.mxu0 0
    %373 = vmatpush.bf16.msra.mxu0 0
    %374 = vmatpush.bf16.msra.mxu0 0
    %375 = vmatpush.bf16.msra.mxu0 0
    %376 = vmatpush.bf16.msra.mxu0 0
    %377 = vmatpush.bf16.msra.mxu0 0
    %378 = vmatpush.bf16.msra.mxu0 0
    %379 = vmatpush.bf16.msra.mxu0 %v370
    %380 = vmatmul.bf16.gmra.mxu0 %v367
    %v381 = vpop.f32.mrf.mxu0
    %v382 = vadd.f32 0.0, %v381
    %v383 = vpop.f32.mrf.mxu0
    %384 = vdwg.mxu0
    %v385 = vadd.f32 %v306, %v382
    %386 = vrot.lane.b32.xlu0 %v155, 104
    %v387 = vpop.permute.xlu0 %386
    %388 = vrot.lane.b32.xlu0 %v155, 72
    %v389 = vpop.permute.xlu0 %388
    %v391 = vsel %vm159, %v387, 0
    %v394 = vsel %vm159, %v389, 0
    %396 = vmatpush.bf16.xpose.msra.mxu0 0
    %397 = vmatpush.bf16.xpose.msra.mxu0 0
    %398 = vmatpush.bf16.xpose.msra.mxu0 0
    %399 = vmatpush.bf16.xpose.msra.mxu0 0
    %400 = vmatpush.bf16.xpose.msra.mxu0 0
    %401 = vmatpush.bf16.xpose.msra.mxu0 0
    %402 = vmatpush.bf16.xpose.msra.mxu0 0
    %403 = vmatpush.bf16.xpose.msra.mxu0 %v394
    %404 = vmatmul.bf16.gmra.mxu0 %v391
    %v405 = vpop.f32.mrf.mxu0
    %v406 = vadd.f32 %v59, %v405
    %v407 = vpop.f32.mrf.mxu0
    %408 = vdwg.mxu0
    %v409 = vsel %vm159, %v406, -inf
    %410 = vmax.xlane.f32.xlu0 %v409
    %v411 = vpop.xlane.xlu0 %410
    %v412 = vsub.f32 %v406, %v411
    %v413 = vmul.f32 %v412, 1.442695
    %v414 = vpow.pop %v413
    %v415 = vsel %vm159, %v414, 0.0
    %416 = vadd.xlane.f32.xlu0 %v415
    %v417 = vpop.xlane.xlu0 %416
    %v418 = vrcp.pop %v417
    %v419 = vmul.f32 %v414, %v418
    %v420 = vpack.c.bf16 %v419, %v419
    %421 = vrot.lane.b32.xlu0 %v155, 40
    %v422 = vpop.permute.xlu0 %421
    %v424 = vsel %vm159, %v420, 0
    %v427 = vsel %vm196, %v422, 0
    %429 = vmatpush.bf16.msra.mxu0 0
    %430 = vmatpush.bf16.msra.mxu0 0
    %431 = vmatpush.bf16.msra.mxu0 0
    %432 = vmatpush.bf16.msra.mxu0 0
    %433 = vmatpush.bf16.msra.mxu0 0
    %434 = vmatpush.bf16.msra.mxu0 0
    %435 = vmatpush.bf16.msra.mxu0 0
    %436 = vmatpush.bf16.msra.mxu0 %v427
    %437 = vmatmul.bf16.gmra.mxu0 %v424
    %v438 = vpop.f32.mrf.mxu0
    %v439 = vadd.f32 0.0, %v438
    %v440 = vpop.f32.mrf.mxu0
    %441 = vdwg.mxu0
    %v442 = vpack.c.bf16 %v439, %v439
    %v444 = vsel %vm159, %v442, 0
    %v447 = vsel %vm196, %v154, 0
    %449 = vmatpush.bf16.msra.mxu0 0
    %450 = vmatpush.bf16.msra.mxu0 0
    %451 = vmatpush.bf16.msra.mxu0 0
    %452 = vmatpush.bf16.msra.mxu0 0
    %453 = vmatpush.bf16.msra.mxu0 0
    %454 = vmatpush.bf16.msra.mxu0 0
    %455 = vmatpush.bf16.msra.mxu0 0
    %456 = vmatpush.bf16.msra.mxu0 %v447
    %457 = vmatmul.bf16.gmra.mxu0 %v444
    %v458 = vpop.f32.mrf.mxu0
    %v459 = vadd.f32 0.0, %v458
    %v460 = vpop.f32.mrf.mxu0
    %461 = vdwg.mxu0
    %v462 = vadd.f32 %v385, %v459
    %v463 = vpack.c.bf16 %v149, %v149
    %465 = vrot.lane.b32.xlu0 %v463, 96
    %v466 = vpop.permute.xlu0 %465
    %v468 = vsel %vm159, %v463, 0
    %v471 = vsel %vm159, %v466, 0
    %473 = vmatpush.bf16.xpose.msra.mxu0 0
    %474 = vmatpush.bf16.xpose.msra.mxu0 0
    %475 = vmatpush.bf16.xpose.msra.mxu0 0
    %476 = vmatpush.bf16.xpose.msra.mxu0 0
    %477 = vmatpush.bf16.xpose.msra.mxu0 0
    %478 = vmatpush.bf16.xpose.msra.mxu0 0
    %479 = vmatpush.bf16.xpose.msra.mxu0 0
    %480 = vmatpush.bf16.xpose.msra.mxu0 %v471
    %481 = vmatmul.bf16.gmra.mxu0 %v468
    %v482 = vpop.f32.mrf.mxu0
    %v483 = vadd.f32 %v65, %v482
    %v484 = vpop.f32.mrf.mxu0
    %485 = vdwg.mxu0
    %v486 = vsel %vm159, %v483, -inf
    %487 = vmax.xlane.f32.xlu0 %v486
    %v488 = vpop.xlane.xlu0 %487
    %v489 = vsub.f32 %v483, %v488
    %v490 = vmul.f32 %v489, 1.442695
    %v491 = vpow.pop %v490
    %v492 = vsel %vm159, %v491, 0.0
    %493 = vadd.xlane.f32.xlu0 %v492
    %v494 = vpop.xlane.xlu0 %493
    %v495 = vrcp.pop %v494
    %v496 = vmul.f32 %v491, %v495
    %v497 = vpack.c.bf16 %v496, %v496
    %498 = vrot.lane.b32.xlu0 %v463, 64
    %v499 = vpop.permute.xlu0 %498
    %v501 = vsel %vm159, %v497, 0
    %v504 = vsel %vm196, %v499, 0
    %506 = vmatpush.bf16.msra.mxu0 0
    %507 = vmatpush.bf16.msra.mxu0 0
    %508 = vmatpush.bf16.msra.mxu0 0
    %509 = vmatpush.bf16.msra.mxu0 0
    %510 = vmatpush.bf16.msra.mxu0 0
    %511 = vmatpush.bf16.msra.mxu0 0
    %512 = vmatpush.bf16.msra.mxu0 0
    %513 = vmatpush.bf16.msra.mxu0 %v504
    %514 = vmatmul.bf16.gmra.mxu0 %v501
    %v515 = vpop.f32.mrf.mxu0
    %v516 = vadd.f32 0.0, %v515
    %v517 = vpop.f32.mrf.mxu0
    %518 = vdwg.mxu0
    %v519 = vpack.c.bf16 %v516, %v516
    %520 = vrot.lane.b32.xlu0 %v463, 120
    %v521 = vpop.permute.xlu0 %520
    %522 = vrot.lane.b32.xlu0 %v463, 88
    %v523 = vpop.permute.xlu0 %522
    %v525 = vsel %vm159, %v521, 0
    %v528 = vsel %vm159, %v523, 0
    %530 = vmatpush.bf16.xpose.msra.mxu0 0
    %531 = vmatpush.bf16.xpose.msra.mxu0 0
    %532 = vmatpush.bf16.xpose.msra.mxu0 0
    %533 = vmatpush.bf16.xpose.msra.mxu0 0
    %534 = vmatpush.bf16.xpose.msra.mxu0 0
    %535 = vmatpush.bf16.xpose.msra.mxu0 0
    %536 = vmatpush.bf16.xpose.msra.mxu0 0
    %537 = vmatpush.bf16.xpose.msra.mxu0 %v528
    %538 = vmatmul.bf16.gmra.mxu0 %v525
    %v539 = vpop.f32.mrf.mxu0
    %v540 = vadd.f32 %v66, %v539
    %v541 = vpop.f32.mrf.mxu0
    %542 = vdwg.mxu0
    %v543 = vsel %vm159, %v540, -inf
    %544 = vmax.xlane.f32.xlu0 %v543
    %v545 = vpop.xlane.xlu0 %544
    %v546 = vsub.f32 %v540, %v545
    %v547 = vmul.f32 %v546, 1.442695
    %v548 = vpow.pop %v547
    %v549 = vsel %vm159, %v548, 0.0
    %550 = vadd.xlane.f32.xlu0 %v549
    %v551 = vpop.xlane.xlu0 %550
    %v552 = vrcp.pop %v551
    %v553 = vmul.f32 %v548, %v552
    %v554 = vpack.c.bf16 %v553, %v553
    %555 = vrot.lane.b32.xlu0 %v463, 56
    %v556 = vpop.permute.xlu0 %555
    %v558 = vsel %vm159, %v554, 0
    %v561 = vsel %vm196, %v556, 0
    %563 = vmatpush.bf16.msra.mxu0 0
    %564 = vmatpush.bf16.msra.mxu0 0
    %565 = vmatpush.bf16.msra.mxu0 0
    %566 = vmatpush.bf16.msra.mxu0 0
    %567 = vmatpush.bf16.msra.mxu0 0
    %568 = vmatpush.bf16.msra.mxu0 0
    %569 = vmatpush.bf16.msra.mxu0 0
    %570 = vmatpush.bf16.msra.mxu0 %v561
    %571 = vmatmul.bf16.gmra.mxu0 %v558
    %v572 = vpop.f32.mrf.mxu0
    %v573 = vadd.f32 0.0, %v572
    %v574 = vpop.f32.mrf.mxu0
    %575 = vdwg.mxu0
    %v576 = vpack.c.bf16 %v573, %v573
    %v578 = vsel %vm159, %v576, 0
    %580 = vmatpush.bf16.msra.mxu0 0
    %581 = vmatpush.bf16.msra.mxu0 0
    %582 = vmatpush.bf16.msra.mxu0 0
    %583 = vmatpush.bf16.msra.mxu0 0
    %584 = vmatpush.bf16.msra.mxu0 0
    %585 = vmatpush.bf16.msra.mxu0 0
    %586 = vmatpush.bf16.msra.mxu0 0
    %587 = vmatpush.bf16.msra.mxu0 %v275
    %588 = vmatmul.bf16.gmra.mxu0 %v578
    %v589 = vpop.f32.mrf.mxu0
    %v590 = vadd.f32 0.0, %v589
    %v591 = vpop.f32.mrf.mxu0
    %592 = vdwg.mxu0
    %v594 = vsel %vm159, %v519, 0
    %596 = vmatpush.bf16.msra.mxu0 0
    %597 = vmatpush.bf16.msra.mxu0 0
    %598 = vmatpush.bf16.msra.mxu0 0
    %599 = vmatpush.bf16.msra.mxu0 0
    %600 = vmatpush.bf16.msra.mxu0 0
    %601 = vmatpush.bf16.msra.mxu0 0
    %602 = vmatpush.bf16.msra.mxu0 0
    %603 = vmatpush.bf16.msra.mxu0 %v294
    %604 = vmatmul.bf16.gmra.mxu0 %v594
    %v605 = vpop.f32.mrf.mxu0
    %v606 = vadd.f32 %v590, %v605
    %v607 = vpop.f32.mrf.mxu0
    %608 = vdwg.mxu0
    %609 = vrot.lane.b32.xlu0 %v463, 112
    %v610 = vpop.permute.xlu0 %609
    %611 = vrot.lane.b32.xlu0 %v463, 80
    %v612 = vpop.permute.xlu0 %611
    %v614 = vsel %vm159, %v610, 0
    %v617 = vsel %vm159, %v612, 0
    %619 = vmatpush.bf16.xpose.msra.mxu0 0
    %620 = vmatpush.bf16.xpose.msra.mxu0 0
    %621 = vmatpush.bf16.xpose.msra.mxu0 0
    %622 = vmatpush.bf16.xpose.msra.mxu0 0
    %623 = vmatpush.bf16.xpose.msra.mxu0 0
    %624 = vmatpush.bf16.xpose.msra.mxu0 0
    %625 = vmatpush.bf16.xpose.msra.mxu0 0
    %626 = vmatpush.bf16.xpose.msra.mxu0 %v617
    %627 = vmatmul.bf16.gmra.mxu0 %v614
    %v628 = vpop.f32.mrf.mxu0
    %v629 = vadd.f32 %v67, %v628
    %v630 = vpop.f32.mrf.mxu0
    %631 = vdwg.mxu0
    %v632 = vsel %vm159, %v629, -inf
    %633 = vmax.xlane.f32.xlu0 %v632
    %v634 = vpop.xlane.xlu0 %633
    %v635 = vsub.f32 %v629, %v634
    %v636 = vmul.f32 %v635, 1.442695
    %v637 = vpow.pop %v636
    %v638 = vsel %vm159, %v637, 0.0
    %639 = vadd.xlane.f32.xlu0 %v638
    %v640 = vpop.xlane.xlu0 %639
    %v641 = vrcp.pop %v640
    %v642 = vmul.f32 %v637, %v641
    %v643 = vpack.c.bf16 %v642, %v642
    %644 = vrot.lane.b32.xlu0 %v463, 48
    %v645 = vpop.permute.xlu0 %644
    %v647 = vsel %vm159, %v643, 0
    %v650 = vsel %vm196, %v645, 0
    %652 = vmatpush.bf16.msra.mxu0 0
    %653 = vmatpush.bf16.msra.mxu0 0
    %654 = vmatpush.bf16.msra.mxu0 0
    %655 = vmatpush.bf16.msra.mxu0 0
    %656 = vmatpush.bf16.msra.mxu0 0
    %657 = vmatpush.bf16.msra.mxu0 0
    %658 = vmatpush.bf16.msra.mxu0 0
    %659 = vmatpush.bf16.msra.mxu0 %v650
    %660 = vmatmul.bf16.gmra.mxu0 %v647
    %v661 = vpop.f32.mrf.mxu0
    %v662 = vadd.f32 0.0, %v661
    %v663 = vpop.f32.mrf.mxu0
    %664 = vdwg.mxu0
    %v665 = vpack.c.bf16 %v662, %v662
    %v667 = vsel %vm159, %v665, 0
    %669 = vmatpush.bf16.msra.mxu0 0
    %670 = vmatpush.bf16.msra.mxu0 0
    %671 = vmatpush.bf16.msra.mxu0 0
    %672 = vmatpush.bf16.msra.mxu0 0
    %673 = vmatpush.bf16.msra.mxu0 0
    %674 = vmatpush.bf16.msra.mxu0 0
    %675 = vmatpush.bf16.msra.mxu0 0
    %676 = vmatpush.bf16.msra.mxu0 %v370
    %677 = vmatmul.bf16.gmra.mxu0 %v667
    %v678 = vpop.f32.mrf.mxu0
    %v679 = vadd.f32 0.0, %v678
    %v680 = vpop.f32.mrf.mxu0
    %681 = vdwg.mxu0
    %v682 = vadd.f32 %v606, %v679
    %683 = vrot.lane.b32.xlu0 %v463, 104
    %v684 = vpop.permute.xlu0 %683
    %685 = vrot.lane.b32.xlu0 %v463, 72
    %v686 = vpop.permute.xlu0 %685
    %v688 = vsel %vm159, %v684, 0
    %v691 = vsel %vm159, %v686, 0
    %693 = vmatpush.bf16.xpose.msra.mxu0 0
    %694 = vmatpush.bf16.xpose.msra.mxu0 0
    %695 = vmatpush.bf16.xpose.msra.mxu0 0
    %696 = vmatpush.bf16.xpose.msra.mxu0 0
    %697 = vmatpush.bf16.xpose.msra.mxu0 0
    %698 = vmatpush.bf16.xpose.msra.mxu0 0
    %699 = vmatpush.bf16.xpose.msra.mxu0 0
    %700 = vmatpush.bf16.xpose.msra.mxu0 %v691
    %701 = vmatmul.bf16.gmra.mxu0 %v688
    %v702 = vpop.f32.mrf.mxu0
    %v703 = vadd.f32 %v68, %v702
    %v704 = vpop.f32.mrf.mxu0
    %705 = vdwg.mxu0
    %v706 = vsel %vm159, %v703, -inf
    %707 = vmax.xlane.f32.xlu0 %v706
    %v708 = vpop.xlane.xlu0 %707
    %v709 = vsub.f32 %v703, %v708
    %v710 = vmul.f32 %v709, 1.442695
    %v711 = vpow.pop %v710
    %v712 = vsel %vm159, %v711, 0.0
    %713 = vadd.xlane.f32.xlu0 %v712
    %v714 = vpop.xlane.xlu0 %713
    %v715 = vrcp.pop %v714
    %v716 = vmul.f32 %v711, %v715
    %v717 = vpack.c.bf16 %v716, %v716
    %718 = vrot.lane.b32.xlu0 %v463, 40
    %v719 = vpop.permute.xlu0 %718
    %v721 = vsel %vm159, %v717, 0
    %v724 = vsel %vm196, %v719, 0
    %726 = vmatpush.bf16.msra.mxu0 0
    %727 = vmatpush.bf16.msra.mxu0 0
    %728 = vmatpush.bf16.msra.mxu0 0
    %729 = vmatpush.bf16.msra.mxu0 0
    %730 = vmatpush.bf16.msra.mxu0 0
    %731 = vmatpush.bf16.msra.mxu0 0
    %732 = vmatpush.bf16.msra.mxu0 0
    %733 = vmatpush.bf16.msra.mxu0 %v724
    %734 = vmatmul.bf16.gmra.mxu0 %v721
    %v735 = vpop.f32.mrf.mxu0
    %v736 = vadd.f32 0.0, %v735
    %v737 = vpop.f32.mrf.mxu0
    %738 = vdwg.mxu0
    %v739 = vpack.c.bf16 %v736, %v736
    %v741 = vsel %vm159, %v739, 0
    %743 = vmatpush.bf16.msra.mxu0 0
    %744 = vmatpush.bf16.msra.mxu0 0
    %745 = vmatpush.bf16.msra.mxu0 0
    %746 = vmatpush.bf16.msra.mxu0 0
    %747 = vmatpush.bf16.msra.mxu0 0
    %748 = vmatpush.bf16.msra.mxu0 0
    %749 = vmatpush.bf16.msra.mxu0 0
    %750 = vmatpush.bf16.msra.mxu0 %v447
    %751 = vmatmul.bf16.gmra.mxu0 %v741
    %v752 = vpop.f32.mrf.mxu0
    %v753 = vadd.f32 0.0, %v752
    %v754 = vpop.f32.mrf.mxu0
    %755 = vdwg.mxu0
    %v756 = vadd.f32 %v682, %v753
    %v757 = vadd.f32 %v43, %v462
    %v758 = vadd.f32 %v44, %v756
    %v759 = vld [vmem:[%s6] sm:$0x1]
    %v760 = vmul.f32 %v757, %v757
    %v761 = vmul.f32 %v758, %v758
    %v762 = vsel %vm72, %v760, 0.0
    %763 = vadd.xlane.f32.xlu0 %v762
    %v764 = vpop.xlane.xlu0 %763
    %v765 = vsel %vm72, %v761, 0.0
    %766 = vadd.xlane.f32.xlu0 %v765
    %v767 = vpop.xlane.xlu0 %766
    %v768 = vmul.f32 %v764, %v85
    %v769 = vmul.f32 %v767, %v85
    %v770 = vadd.f32 %v768, 1e-06
    %v771 = vadd.f32 %v769, 1e-06
    %v772 = vrsqrt.pop %v770
    %v773 = vmul.f32 %v772, %v770
    %v774 = vmul.f32 %v773, %v772
    %v775 = vmul.f32 0.5, %v774
    %v776 = vsub.f32 1.5, %v775
    %v777 = vmul.f32 %v772, %v776
    %vm778 = vweird.f32 %v770
    %vm779 = vweird.f32 %v772
    %vm780 = vmor %vm778, %vm779
    %v781 = vsel %vm780, %v772, %v777
    %v782 = vrsqrt.pop %v771
    %v783 = vmul.f32 %v782, %v771
    %v784 = vmul.f32 %v783, %v782
    %v785 = vmul.f32 0.5, %v784
    %v786 = vsub.f32 1.5, %v785
    %v787 = vmul.f32 %v782, %v786
    %vm788 = vweird.f32 %v771
    %vm789 = vweird.f32 %v782
    %vm790 = vmor %vm788, %vm789
    %v791 = vsel %vm790, %v782, %v787
    %v792 = vmul.f32 %v757, %v781
    %v793 = vmul.f32 %v758, %v791
    %v795 = vperm.slane %v759, 0
    %v797 = vmul.f32 %v792, %v795
    %v798 = vmul.f32 %v793, %v795
    %v799 = vpack.c.bf16 %v798, %v797
    %v800 = vld [vmem:[%s7] sm:$0xf]
    %v801 = vld [vmem:[%s7 + $0x4] sm:$0xf]
    %v802 = vld [vmem:[%s7 + $0x8] sm:$0xf]
    %v803 = vld [vmem:[%s7 + $0xc] sm:$0xf]
    %v808 = vunpack.c.l.b16 %v800
    %v809 = vunpack.c.l.b16 %v801
    %v810 = vunpack.c.l.b16 %v802
    %v811 = vunpack.c.l.b16 %v803
    %v812 = vpack.c.b16 %v809, %v808
    %v813 = vpack.c.b16 %v811, %v810
    %v817 = vsel %vm72, %v799, 0
    %819 = vmatpush.bf16.msra.mxu0 0
    %820 = vmatpush.bf16.msra.mxu0 0
    %821 = vmatpush.bf16.msra.mxu0 0
    %822 = vmatpush.bf16.msra.mxu0 0
    %823 = vmatpush.bf16.msra.mxu0 0
    %824 = vmatpush.bf16.msra.mxu0 0
    %825 = vmatpush.bf16.msra.mxu0 %v813
    %826 = vmatpush.bf16.msra.mxu0 %v812
    %827 = vmatmul.bf16.gmra.mxu0 %v817
    %v828 = vpop.f32.mrf.mxu0
    %v829 = vadd.f32 0.0, %v828
    %v830 = vpop.f32.mrf.mxu0
    %v831 = vadd.f32 0.0, %v830
    %832 = vdwg.mxu0
    %v833 = vmax.f32 %v829, 0.0
    %v834 = vmax.f32 %v831, 0.0
    %v835 = vpack.c.bf16 %v834, %v833
    %v836 = vld [vmem:[%s8] sm:$0xf]
    %v837 = vld [vmem:[%s8 + $0x4] sm:$0xf]
    %v838 = vld [vmem:[%s8 + $0x8] sm:$0xf]
    %v839 = vld [vmem:[%s8 + $0xc] sm:$0xf]
    %v840 = vld [vmem:[%s8 + $0x10] sm:$0xf]
    %v841 = vld [vmem:[%s8 + $0x14] sm:$0xf]
    %v842 = vld [vmem:[%s8 + $0x18] sm:$0xf]
    %v843 = vld [vmem:[%s8 + $0x1c] sm:$0xf]
    %v852 = vunpack.c.l.b16 %v836
    %v853 = vunpack.c.l.b16 %v837
    %v854 = vunpack.c.l.b16 %v838
    %v855 = vunpack.c.l.b16 %v839
    %v856 = vunpack.c.l.b16 %v840
    %v857 = vunpack.c.l.b16 %v841
    %v858 = vunpack.c.l.b16 %v842
    %v859 = vunpack.c.l.b16 %v843
    %v860 = vpack.c.b16 %v853, %v852
    %v861 = vpack.c.b16 %v855, %v854
    %v862 = vpack.c.b16 %v857, %v856
    %v863 = vpack.c.b16 %v859, %v858
    %vm868 = vcmask 523264
    %v870 = vsel %vm868, %v835, 0
    %872 = vmatpush.bf16.msra.mxu0 0
    %873 = vmatpush.bf16.msra.mxu0 0
    %874 = vmatpush.bf16.msra.mxu0 0
    %875 = vmatpush.bf16.msra.mxu0 0
    %876 = vmatpush.bf16.msra.mxu0 %v863
    %877 = vmatpush.bf16.msra.mxu0 %v862
    %878 = vmatpush.bf16.msra.mxu0 %v861
    %879 = vmatpush.bf16.msra.mxu0 %v860
    %880 = vmatmul.bf16.gmra.mxu0 %v870
    %v881 = vpop.f32.mrf.mxu0
    %v882 = vadd.f32 0.0, %v881
    %v883 = vpop.f32.mrf.mxu0
    %v884 = vadd.f32 0.0, %v883
    %885 = vdwg.mxu0
    %v886 = vadd.f32 %v757, %v882
    %v887 = vadd.f32 %v758, %v884
    %s888 = scalar_lea.vmem %s3, 1
    %v889 = vld [vmem:[%s888] sm:$0x1]
    %v890 = vmul.f32 %v886, %v886
    %v891 = vmul.f32 %v887, %v887
    %v892 = vsel %vm72, %v890, 0.0
    %893 = vadd.xlane.f32.xlu0 %v892
    %v894 = vpop.xlane.xlu0 %893
    %v895 = vsel %vm72, %v891, 0.0
    %896 = vadd.xlane.f32.xlu0 %v895
    %v897 = vpop.xlane.xlu0 %896
    %v898 = vmul.f32 %v894, %v85
    %v899 = vmul.f32 %v897, %v85
    %v900 = vadd.f32 %v898, 1e-06
    %v901 = vadd.f32 %v899, 1e-06
    %v902 = vrsqrt.pop %v900
    %v903 = vmul.f32 %v902, %v900
    %v904 = vmul.f32 %v903, %v902
    %v905 = vmul.f32 0.5, %v904
    %v906 = vsub.f32 1.5, %v905
    %v907 = vmul.f32 %v902, %v906
    %vm908 = vweird.f32 %v900
    %vm909 = vweird.f32 %v902
    %vm910 = vmor %vm908, %vm909
    %v911 = vsel %vm910, %v902, %v907
    %v912 = vrsqrt.pop %v901
    %v913 = vmul.f32 %v912, %v901
    %v914 = vmul.f32 %v913, %v912
    %v915 = vmul.f32 0.5, %v914
    %v916 = vsub.f32 1.5, %v915
    %v917 = vmul.f32 %v912, %v916
    %vm918 = vweird.f32 %v901
    %vm919 = vweird.f32 %v912
    %vm920 = vmor %vm918, %vm919
    %v921 = vsel %vm920, %v912, %v917
    %v922 = vmul.f32 %v886, %v911
    %v923 = vmul.f32 %v887, %v921
    %v925 = vperm.slane %v889, 0
    %v927 = vmul.f32 %v922, %v925
    %v928 = vmul.f32 %v923, %v925
    %v929 = vpack.c.bf16 %v928, %v927
    %s930 = scalar_lea.vmem %s4, 16
    %v931 = vld [vmem:[%s930] sm:$0xf]
    %v932 = vld [vmem:[%s930 + $0x4] sm:$0xf]
    %v933 = vld [vmem:[%s930 + $0x8] sm:$0xf]
    %v934 = vld [vmem:[%s930 + $0xc] sm:$0xf]
    %v939 = vunpack.c.l.b16 %v931
    %v940 = vunpack.c.l.b16 %v932
    %v941 = vunpack.c.l.b16 %v933
    %v942 = vunpack.c.l.b16 %v934
    %v943 = vpack.c.b16 %v940, %v939
    %v944 = vpack.c.b16 %v942, %v941
    %v948 = vsel %vm72, %v929, 0
    %950 = vmatpush.bf16.msra.mxu0 0
    %951 = vmatpush.bf16.msra.mxu0 0
    %952 = vmatpush.bf16.msra.mxu0 0
    %953 = vmatpush.bf16.msra.mxu0 0
    %954 = vmatpush.bf16.msra.mxu0 0
    %955 = vmatpush.bf16.msra.mxu0 0
    %956 = vmatpush.bf16.msra.mxu0 %v944
    %957 = vmatpush.bf16.msra.mxu0 %v943
    %958 = vmatmul.bf16.gmra.mxu0 %v948
    %v959 = vpop.f32.mrf.mxu0
    %v960 = vadd.f32 0.0, %v959
    %v961 = vpop.f32.mrf.mxu0
    %v962 = vadd.f32 0.0, %v961
    %963 = vdwg.mxu0
    %s964 = scalar_lea.vmem %s5, 16
    %v965 = vld [vmem:[%s964] sm:$0xf]
    %v966 = vld [vmem:[%s964 + $0x4] sm:$0xf]
    %v967 = vld [vmem:[%s964 + $0x8] sm:$0xf]
    %v968 = vld [vmem:[%s964 + $0xc] sm:$0xf]
    %v969 = vpack.c.bf16 %v960, %v960
    %971 = vrot.lane.b32.xlu0 %v969, 96
    %v972 = vpop.permute.xlu0 %971
    %v974 = vsel %vm159, %v969, 0
    %v977 = vsel %vm159, %v972, 0
    %979 = vmatpush.bf16.xpose.msra.mxu0 0
    %980 = vmatpush.bf16.xpose.msra.mxu0 0
    %981 = vmatpush.bf16.xpose.msra.mxu0 0
    %982 = vmatpush.bf16.xpose.msra.mxu0 0
    %983 = vmatpush.bf16.xpose.msra.mxu0 0
    %984 = vmatpush.bf16.xpose.msra.mxu0 0
    %985 = vmatpush.bf16.xpose.msra.mxu0 0
    %986 = vmatpush.bf16.xpose.msra.mxu0 %v977
    %987 = vmatmul.bf16.gmra.mxu0 %v974
    %v988 = vpop.f32.mrf.mxu0
    %v989 = vadd.f32 %v50, %v988
    %v990 = vpop.f32.mrf.mxu0
    %991 = vdwg.mxu0
    %v992 = vsel %vm159, %v989, -inf
    %993 = vmax.xlane.f32.xlu0 %v992
    %v994 = vpop.xlane.xlu0 %993
    %v995 = vsub.f32 %v989, %v994
    %v996 = vmul.f32 %v995, 1.442695
    %v997 = vpow.pop %v996
    %v998 = vsel %vm159, %v997, 0.0
    %999 = vadd.xlane.f32.xlu0 %v998
    %v1000 = vpop.xlane.xlu0 %999
    %v1001 = vrcp.pop %v1000
    %v1002 = vmul.f32 %v997, %v1001
    %v1003 = vpack.c.bf16 %v1002, %v1002
    %1004 = vrot.lane.b32.xlu0 %v969, 64
    %v1005 = vpop.permute.xlu0 %1004
    %v1007 = vsel %vm159, %v1003, 0
    %v1010 = vsel %vm196, %v1005, 0
    %1012 = vmatpush.bf16.msra.mxu0 0
    %1013 = vmatpush.bf16.msra.mxu0 0
    %1014 = vmatpush.bf16.msra.mxu0 0
    %1015 = vmatpush.bf16.msra.mxu0 0
    %1016 = vmatpush.bf16.msra.mxu0 0
    %1017 = vmatpush.bf16.msra.mxu0 0
    %1018 = vmatpush.bf16.msra.mxu0 0
    %1019 = vmatpush.bf16.msra.mxu0 %v1010
    %1020 = vmatmul.bf16.gmra.mxu0 %v1007
    %v1021 = vpop.f32.mrf.mxu0
    %v1022 = vadd.f32 0.0, %v1021
    %v1023 = vpop.f32.mrf.mxu0
    %1024 = vdwg.mxu0
    %v1025 = vpack.c.bf16 %v1022, %v1022
    %1026 = vrot.lane.b32.xlu0 %v969, 120
    %v1027 = vpop.permute.xlu0 %1026
    %1028 = vrot.lane.b32.xlu0 %v969, 88
    %v1029 = vpop.permute.xlu0 %1028
    %v1031 = vsel %vm159, %v1027, 0
    %v1034 = vsel %vm159, %v1029, 0
    %1036 = vmatpush.bf16.xpose.msra.mxu0 0
    %1037 = vmatpush.bf16.xpose.msra.mxu0 0
    %1038 = vmatpush.bf16.xpose.msra.mxu0 0
    %1039 = vmatpush.bf16.xpose.msra.mxu0 0
    %1040 = vmatpush.bf16.xpose.msra.mxu0 0
    %1041 = vmatpush.bf16.xpose.msra.mxu0 0
    %1042 = vmatpush.bf16.xpose.msra.mxu0 0
    %1043 = vmatpush.bf16.xpose.msra.mxu0 %v1034
    %1044 = vmatmul.bf16.gmra.mxu0 %v1031
    %v1045 = vpop.f32.mrf.mxu0
    %v1046 = vadd.f32 %v53, %v1045
    %v1047 = vpop.f32.mrf.mxu0
    %1048 = vdwg.mxu0
    %v1049 = vsel %vm159, %v1046, -inf
    %1050 = vmax.xlane.f32.xlu0 %v1049
    %v1051 = vpop.xlane.xlu0 %1050
    %v1052 = vsub.f32 %v1046, %v1051
    %v1053 = vmul.f32 %v1052, 1.442695
    %v1054 = vpow.pop %v1053
    %v1055 = vsel %vm159, %v1054, 0.0
    %1056 = vadd.xlane.f32.xlu0 %v1055
    %v1057 = vpop.xlane.xlu0 %1056
    %v1058 = vrcp.pop %v1057
    %v1059 = vmul.f32 %v1054, %v1058
    %v1060 = vpack.c.bf16 %v1059, %v1059
    %1061 = vrot.lane.b32.xlu0 %v969, 56
    %v1062 = vpop.permute.xlu0 %1061
    %v1064 = vsel %vm159, %v1060, 0
    %v1067 = vsel %vm196, %v1062, 0
    %1069 = vmatpush.bf16.msra.mxu0 0
    %1070 = vmatpush.bf16.msra.mxu0 0
    %1071 = vmatpush.bf16.msra.mxu0 0
    %1072 = vmatpush.bf16.msra.mxu0 0
    %1073 = vmatpush.bf16.msra.mxu0 0
    %1074 = vmatpush.bf16.msra.mxu0 0
    %1075 = vmatpush.bf16.msra.mxu0 0
    %1076 = vmatpush.bf16.msra.mxu0 %v1067
    %1077 = vmatmul.bf16.gmra.mxu0 %v1064
    %v1078 = vpop.f32.mrf.mxu0
    %v1079 = vadd.f32 0.0, %v1078
    %v1080 = vpop.f32.mrf.mxu0
    %1081 = vdwg.mxu0
    %v1082 = vpack.c.bf16 %v1079, %v1079
    %v1084 = vsel %vm159, %v1082, 0
    %v1087 = vsel %vm196, %v966, 0
    %1089 = vmatpush.bf16.msra.mxu0 0
    %1090 = vmatpush.bf16.msra.mxu0 0
    %1091 = vmatpush.bf16.msra.mxu0 0
    %1092 = vmatpush.bf16.msra.mxu0 0
    %1093 = vmatpush.bf16.msra.mxu0 0
    %1094 = vmatpush.bf16.msra.mxu0 0
    %1095 = vmatpush.bf16.msra.mxu0 0
    %1096 = vmatpush.bf16.msra.mxu0 %v1087
    %1097 = vmatmul.bf16.gmra.mxu0 %v1084
    %v1098 = vpop.f32.mrf.mxu0
    %v1099 = vadd.f32 0.0, %v1098
    %v1100 = vpop.f32.mrf.mxu0
    %1101 = vdwg.mxu0
    %v1103 = vsel %vm159, %v1025, 0
    %v1106 = vsel %vm196, %v965, 0
    %1108 = vmatpush.bf16.msra.mxu0 0
    %1109 = vmatpush.bf16.msra.mxu0 0
    %1110 = vmatpush.bf16.msra.mxu0 0
    %1111 = vmatpush.bf16.msra.mxu0 0
    %1112 = vmatpush.bf16.msra.mxu0 0
    %1113 = vmatpush.bf16.msra.mxu0 0
    %1114 = vmatpush.bf16.msra.mxu0 0
    %1115 = vmatpush.bf16.msra.mxu0 %v1106
    %1116 = vmatmul.bf16.gmra.mxu0 %v1103
    %v1117 = vpop.f32.mrf.mxu0
    %v1118 = vadd.f32 %v1099, %v1117
    %v1119 = vpop.f32.mrf.mxu0
    %1120 = vdwg.mxu0
    %1121 = vrot.lane.b32.xlu0 %v969, 112
    %v1122 = vpop.permute.xlu0 %1121
    %1123 = vrot.lane.b32.xlu0 %v969, 80
    %v1124 = vpop.permute.xlu0 %1123
    %v1126 = vsel %vm159, %v1122, 0
    %v1129 = vsel %vm159, %v1124, 0
    %1131 = vmatpush.bf16.xpose.msra.mxu0 0
    %1132 = vmatpush.bf16.xpose.msra.mxu0 0
    %1133 = vmatpush.bf16.xpose.msra.mxu0 0
    %1134 = vmatpush.bf16.xpose.msra.mxu0 0
    %1135 = vmatpush.bf16.xpose.msra.mxu0 0
    %1136 = vmatpush.bf16.xpose.msra.mxu0 0
    %1137 = vmatpush.bf16.xpose.msra.mxu0 0
    %1138 = vmatpush.bf16.xpose.msra.mxu0 %v1129
    %1139 = vmatmul.bf16.gmra.mxu0 %v1126
    %v1140 = vpop.f32.mrf.mxu0
    %v1141 = vadd.f32 %v56, %v1140
    %v1142 = vpop.f32.mrf.mxu0
    %1143 = vdwg.mxu0
    %v1144 = vsel %vm159, %v1141, -inf
    %1145 = vmax.xlane.f32.xlu0 %v1144
    %v1146 = vpop.xlane.xlu0 %1145
    %v1147 = vsub.f32 %v1141, %v1146
    %v1148 = vmul.f32 %v1147, 1.442695
    %v1149 = vpow.pop %v1148
    %v1150 = vsel %vm159, %v1149, 0.0
    %1151 = vadd.xlane.f32.xlu0 %v1150
    %v1152 = vpop.xlane.xlu0 %1151
    %v1153 = vrcp.pop %v1152
    %v1154 = vmul.f32 %v1149, %v1153
    %v1155 = vpack.c.bf16 %v1154, %v1154
    %1156 = vrot.lane.b32.xlu0 %v969, 48
    %v1157 = vpop.permute.xlu0 %1156
    %v1159 = vsel %vm159, %v1155, 0
    %v1162 = vsel %vm196, %v1157, 0
    %1164 = vmatpush.bf16.msra.mxu0 0
    %1165 = vmatpush.bf16.msra.mxu0 0
    %1166 = vmatpush.bf16.msra.mxu0 0
    %1167 = vmatpush.bf16.msra.mxu0 0
    %1168 = vmatpush.bf16.msra.mxu0 0
    %1169 = vmatpush.bf16.msra.mxu0 0
    %1170 = vmatpush.bf16.msra.mxu0 0
    %1171 = vmatpush.bf16.msra.mxu0 %v1162
    %1172 = vmatmul.bf16.gmra.mxu0 %v1159
    %v1173 = vpop.f32.mrf.mxu0
    %v1174 = vadd.f32 0.0, %v1173
    %v1175 = vpop.f32.mrf.mxu0
    %1176 = vdwg.mxu0
    %v1177 = vpack.c.bf16 %v1174, %v1174
    %v1179 = vsel %vm159, %v1177, 0
    %v1182 = vsel %vm196, %v967, 0
    %1184 = vmatpush.bf16.msra.mxu0 0
    %1185 = vmatpush.bf16.msra.mxu0 0
    %1186 = vmatpush.bf16.msra.mxu0 0
    %1187 = vmatpush.bf16.msra.mxu0 0
    %1188 = vmatpush.bf16.msra.mxu0 0
    %1189 = vmatpush.bf16.msra.mxu0 0
    %1190 = vmatpush.bf16.msra.mxu0 0
    %1191 = vmatpush.bf16.msra.mxu0 %v1182
    %1192 = vmatmul.bf16.gmra.mxu0 %v1179
    %v1193 = vpop.f32.mrf.mxu0
    %v1194 = vadd.f32 0.0, %v1193
    %v1195 = vpop.f32.mrf.mxu0
    %1196 = vdwg.mxu0
    %v1197 = vadd.f32 %v1118, %v1194
    %1198 = vrot.lane.b32.xlu0 %v969, 104
    %v1199 = vpop.permute.xlu0 %1198
    %1200 = vrot.lane.b32.xlu0 %v969, 72
    %v1201 = vpop.permute.xlu0 %1200
    %v1203 = vsel %vm159, %v1199, 0
    %v1206 = vsel %vm159, %v1201, 0
    %1208 = vmatpush.bf16.xpose.msra.mxu0 0
    %1209 = vmatpush.bf16.xpose.msra.mxu0 0
    %1210 = vmatpush.bf16.xpose.msra.mxu0 0
    %1211 = vmatpush.bf16.xpose.msra.mxu0 0
    %1212 = vmatpush.bf16.xpose.msra.mxu0 0
    %1213 = vmatpush.bf16.xpose.msra.mxu0 0
    %1214 = vmatpush.bf16.xpose.msra.mxu0 0
    %1215 = vmatpush.bf16.xpose.msra.mxu0 %v1206
    %1216 = vmatmul.bf16.gmra.mxu0 %v1203
    %v1217 = vpop.f32.mrf.mxu0
    %v1218 = vadd.f32 %v59, %v1217
    %v1219 = vpop.f32.mrf.mxu0
    %1220 = vdwg.mxu0
    %v1221 = vsel %vm159, %v1218, -inf
    %1222 = vmax.xlane.f32.xlu0 %v1221
    %v1223 = vpop.xlane.xlu0 %1222
    %v1224 = vsub.f32 %v1218, %v1223
    %v1225 = vmul.f32 %v1224, 1.442695
    %v1226 = vpow.pop %v1225
    %v1227 = vsel %vm159, %v1226, 0.0
    %1228 = vadd.xlane.f32.xlu0 %v1227
    %v1229 = vpop.xlane.xlu0 %1228
    %v1230 = vrcp.pop %v1229
    %v1231 = vmul.f32 %v1226, %v1230
    %v1232 = vpack.c.bf16 %v1231, %v1231
    %1233 = vrot.lane.b32.xlu0 %v969, 40
    %v1234 = vpop.permute.xlu0 %1233
    %v1236 = vsel %vm159, %v1232, 0
    %v1239 = vsel %vm196, %v1234, 0
    %1241 = vmatpush.bf16.msra.mxu0 0
    %1242 = vmatpush.bf16.msra.mxu0 0
    %1243 = vmatpush.bf16.msra.mxu0 0
    %1244 = vmatpush.bf16.msra.mxu0 0
    %1245 = vmatpush.bf16.msra.mxu0 0
    %1246 = vmatpush.bf16.msra.mxu0 0
    %1247 = vmatpush.bf16.msra.mxu0 0
    %1248 = vmatpush.bf16.msra.mxu0 %v1239
    %1249 = vmatmul.bf16.gmra.mxu0 %v1236
    %v1250 = vpop.f32.mrf.mxu0
    %v1251 = vadd.f32 0.0, %v1250
    %v1252 = vpop.f32.mrf.mxu0
    %1253 = vdwg.mxu0
    %v1254 = vpack.c.bf16 %v1251, %v1251
    %v1256 = vsel %vm159, %v1254, 0
    %v1259 = vsel %vm196, %v968, 0
    %1261 = vmatpush.bf16.msra.mxu0 0
    %1262 = vmatpush.bf16.msra.mxu0 0
    %1263 = vmatpush.bf16.msra.mxu0 0
    %1264 = vmatpush.bf16.msra.mxu0 0
    %1265 = vmatpush.bf16.msra.mxu0 0
    %1266 = vmatpush.bf16.msra.mxu0 0
    %1267 = vmatpush.bf16.msra.mxu0 0
    %1268 = vmatpush.bf16.msra.mxu0 %v1259
    %1269 = vmatmul.bf16.gmra.mxu0 %v1256
    %v1270 = vpop.f32.mrf.mxu0
    %v1271 = vadd.f32 0.0, %v1270
    %v1272 = vpop.f32.mrf.mxu0
    %1273 = vdwg.mxu0
    %v1274 = vadd.f32 %v1197, %v1271
    %v1275 = vpack.c.bf16 %v962, %v962
    %1277 = vrot.lane.b32.xlu0 %v1275, 96
    %v1278 = vpop.permute.xlu0 %1277
    %v1280 = vsel %vm159, %v1275, 0
    %v1283 = vsel %vm159, %v1278, 0
    %1285 = vmatpush.bf16.xpose.msra.mxu0 0
    %1286 = vmatpush.bf16.xpose.msra.mxu0 0
    %1287 = vmatpush.bf16.xpose.msra.mxu0 0
    %1288 = vmatpush.bf16.xpose.msra.mxu0 0
    %1289 = vmatpush.bf16.xpose.msra.mxu0 0
    %1290 = vmatpush.bf16.xpose.msra.mxu0 0
    %1291 = vmatpush.bf16.xpose.msra.mxu0 0
    %1292 = vmatpush.bf16.xpose.msra.mxu0 %v1283
    %1293 = vmatmul.bf16.gmra.mxu0 %v1280
    %v1294 = vpop.f32.mrf.mxu0
    %v1295 = vadd.f32 %v65, %v1294
    %v1296 = vpop.f32.mrf.mxu0
    %1297 = vdwg.mxu0
    %v1298 = vsel %vm159, %v1295, -inf
    %1299 = vmax.xlane.f32.xlu0 %v1298
    %v1300 = vpop.xlane.xlu0 %1299
    %v1301 = vsub.f32 %v1295, %v1300
    %v1302 = vmul.f32 %v1301, 1.442695
    %v1303 = vpow.pop %v1302
    %v1304 = vsel %vm159, %v1303, 0.0
    %1305 = vadd.xlane.f32.xlu0 %v1304
    %v1306 = vpop.xlane.xlu0 %1305
    %v1307 = vrcp.pop %v1306
    %v1308 = vmul.f32 %v1303, %v1307
    %v1309 = vpack.c.bf16 %v1308, %v1308
    %1310 = vrot.lane.b32.xlu0 %v1275, 64
    %v1311 = vpop.permute.xlu0 %1310
    %v1313 = vsel %vm159, %v1309, 0
    %v1316 = vsel %vm196, %v1311, 0
    %1318 = vmatpush.bf16.msra.mxu0 0
    %1319 = vmatpush.bf16.msra.mxu0 0
    %1320 = vmatpush.bf16.msra.mxu0 0
    %1321 = vmatpush.bf16.msra.mxu0 0
    %1322 = vmatpush.bf16.msra.mxu0 0
    %1323 = vmatpush.bf16.msra.mxu0 0
    %1324 = vmatpush.bf16.msra.mxu0 0
    %1325 = vmatpush.bf16.msra.mxu0 %v1316
    %1326 = vmatmul.bf16.gmra.mxu0 %v1313
    %v1327 = vpop.f32.mrf.mxu0
    %v1328 = vadd.f32 0.0, %v1327
    %v1329 = vpop.f32.mrf.mxu0
    %1330 = vdwg.mxu0
    %v1331 = vpack.c.bf16 %v1328, %v1328
    %1332 = vrot.lane.b32.xlu0 %v1275, 120
    %v1333 = vpop.permute.xlu0 %1332
    %1334 = vrot.lane.b32.xlu0 %v1275, 88
    %v1335 = vpop.permute.xlu0 %1334
    %v1337 = vsel %vm159, %v1333, 0
    %v1340 = vsel %vm159, %v1335, 0
    %1342 = vmatpush.bf16.xpose.msra.mxu0 0
    %1343 = vmatpush.bf16.xpose.msra.mxu0 0
    %1344 = vmatpush.bf16.xpose.msra.mxu0 0
    %1345 = vmatpush.bf16.xpose.msra.mxu0 0
    %1346 = vmatpush.bf16.xpose.msra.mxu0 0
    %1347 = vmatpush.bf16.xpose.msra.mxu0 0
    %1348 = vmatpush.bf16.xpose.msra.mxu0 0
    %1349 = vmatpush.bf16.xpose.msra.mxu0 %v1340
    %1350 = vmatmul.bf16.gmra.mxu0 %v1337
    %v1351 = vpop.f32.mrf.mxu0
    %v1352 = vadd.f32 %v66, %v1351
    %v1353 = vpop.f32.mrf.mxu0
    %1354 = vdwg.mxu0
    %v1355 = vsel %vm159, %v1352, -inf
    %1356 = vmax.xlane.f32.xlu0 %v1355
    %v1357 = vpop.xlane.xlu0 %1356
    %v1358 = vsub.f32 %v1352, %v1357
    %v1359 = vmul.f32 %v1358, 1.442695
    %v1360 = vpow.pop %v1359
    %v1361 = vsel %vm159, %v1360, 0.0
    %1362 = vadd.xlane.f32.xlu0 %v1361
    %v1363 = vpop.xlane.xlu0 %1362
    %v1364 = vrcp.pop %v1363
    %v1365 = vmul.f32 %v1360, %v1364
    %v1366 = vpack.c.bf16 %v1365, %v1365
    %1367 = vrot.lane.b32.xlu0 %v1275, 56
    %v1368 = vpop.permute.xlu0 %1367
    %v1370 = vsel %vm159, %v1366, 0
    %v1373 = vsel %vm196, %v1368, 0
    %1375 = vmatpush.bf16.msra.mxu0 0
    %1376 = vmatpush.bf16.msra.mxu0 0
    %1377 = vmatpush.bf16.msra.mxu0 0
    %1378 = vmatpush.bf16.msra.mxu0 0
    %1379 = vmatpush.bf16.msra.mxu0 0
    %1380 = vmatpush.bf16.msra.mxu0 0
    %1381 = vmatpush.bf16.msra.mxu0 0
    %1382 = vmatpush.bf16.msra.mxu0 %v1373
    %1383 = vmatmul.bf16.gmra.mxu0 %v1370
    %v1384 = vpop.f32.mrf.mxu0
    %v1385 = vadd.f32 0.0, %v1384
    %v1386 = vpop.f32.mrf.mxu0
    %1387 = vdwg.mxu0
    %v1388 = vpack.c.bf16 %v1385, %v1385
    %v1390 = vsel %vm159, %v1388, 0
    %1392 = vmatpush.bf16.msra.mxu0 0
    %1393 = vmatpush.bf16.msra.mxu0 0
    %1394 = vmatpush.bf16.msra.mxu0 0
    %1395 = vmatpush.bf16.msra.mxu0 0
    %1396 = vmatpush.bf16.msra.mxu0 0
    %1397 = vmatpush.bf16.msra.mxu0 0
    %1398 = vmatpush.bf16.msra.mxu0 0
    %1399 = vmatpush.bf16.msra.mxu0 %v1087
    %1400 = vmatmul.bf16.gmra.mxu0 %v1390
    %v1401 = vpop.f32.mrf.mxu0
    %v1402 = vadd.f32 0.0, %v1401
    %v1403 = vpop.f32.mrf.mxu0
    %1404 = vdwg.mxu0
    %v1406 = vsel %vm159, %v1331, 0
    %1408 = vmatpush.bf16.msra.mxu0 0
    %1409 = vmatpush.bf16.msra.mxu0 0
    %1410 = vmatpush.bf16.msra.mxu0 0
    %1411 = vmatpush.bf16.msra.mxu0 0
    %1412 = vmatpush.bf16.msra.mxu0 0
    %1413 = vmatpush.bf16.msra.mxu0 0
    %1414 = vmatpush.bf16.msra.mxu0 0
    %1415 = vmatpush.bf16.msra.mxu0 %v1106
    %1416 = vmatmul.bf16.gmra.mxu0 %v1406
    %v1417 = vpop.f32.mrf.mxu0
    %v1418 = vadd.f32 %v1402, %v1417
    %v1419 = vpop.f32.mrf.mxu0
    %1420 = vdwg.mxu0
    %1421 = vrot.lane.b32.xlu0 %v1275, 112
    %v1422 = vpop.permute.xlu0 %1421
    %1423 = vrot.lane.b32.xlu0 %v1275, 80
    %v1424 = vpop.permute.xlu0 %1423
    %v1426 = vsel %vm159, %v1422, 0
    %v1429 = vsel %vm159, %v1424, 0
    %1431 = vmatpush.bf16.xpose.msra.mxu0 0
    %1432 = vmatpush.bf16.xpose.msra.mxu0 0
    %1433 = vmatpush.bf16.xpose.msra.mxu0 0
    %1434 = vmatpush.bf16.xpose.msra.mxu0 0
    %1435 = vmatpush.bf16.xpose.msra.mxu0 0
    %1436 = vmatpush.bf16.xpose.msra.mxu0 0
    %1437 = vmatpush.bf16.xpose.msra.mxu0 0
    %1438 = vmatpush.bf16.xpose.msra.mxu0 %v1429
    %1439 = vmatmul.bf16.gmra.mxu0 %v1426
    %v1440 = vpop.f32.mrf.mxu0
    %v1441 = vadd.f32 %v67, %v1440
    %v1442 = vpop.f32.mrf.mxu0
    %1443 = vdwg.mxu0
    %v1444 = vsel %vm159, %v1441, -inf
    %1445 = vmax.xlane.f32.xlu0 %v1444
    %v1446 = vpop.xlane.xlu0 %1445
    %v1447 = vsub.f32 %v1441, %v1446
    %v1448 = vmul.f32 %v1447, 1.442695
    %v1449 = vpow.pop %v1448
    %v1450 = vsel %vm159, %v1449, 0.0
    %1451 = vadd.xlane.f32.xlu0 %v1450
    %v1452 = vpop.xlane.xlu0 %1451
    %v1453 = vrcp.pop %v1452
    %v1454 = vmul.f32 %v1449, %v1453
    %v1455 = vpack.c.bf16 %v1454, %v1454
    %1456 = vrot.lane.b32.xlu0 %v1275, 48
    %v1457 = vpop.permute.xlu0 %1456
    %v1459 = vsel %vm159, %v1455, 0
    %v1462 = vsel %vm196, %v1457, 0
    %1464 = vmatpush.bf16.msra.mxu0 0
    %1465 = vmatpush.bf16.msra.mxu0 0
    %1466 = vmatpush.bf16.msra.mxu0 0
    %1467 = vmatpush.bf16.msra.mxu0 0
    %1468 = vmatpush.bf16.msra.mxu0 0
    %1469 = vmatpush.bf16.msra.mxu0 0
    %1470 = vmatpush.bf16.msra.mxu0 0
    %1471 = vmatpush.bf16.msra.mxu0 %v1462
    %1472 = vmatmul.bf16.gmra.mxu0 %v1459
    %v1473 = vpop.f32.mrf.mxu0
    %v1474 = vadd.f32 0.0, %v1473
    %v1475 = vpop.f32.mrf.mxu0
    %1476 = vdwg.mxu0
    %v1477 = vpack.c.bf16 %v1474, %v1474
    %v1479 = vsel %vm159, %v1477, 0
    %1481 = vmatpush.bf16.msra.mxu0 0
    %1482 = vmatpush.bf16.msra.mxu0 0
    %1483 = vmatpush.bf16.msra.mxu0 0
    %1484 = vmatpush.bf16.msra.mxu0 0
    %1485 = vmatpush.bf16.msra.mxu0 0
    %1486 = vmatpush.bf16.msra.mxu0 0
    %1487 = vmatpush.bf16.msra.mxu0 0
    %1488 = vmatpush.bf16.msra.mxu0 %v1182
    %1489 = vmatmul.bf16.gmra.mxu0 %v1479
    %v1490 = vpop.f32.mrf.mxu0
    %v1491 = vadd.f32 0.0, %v1490
    %v1492 = vpop.f32.mrf.mxu0
    %1493 = vdwg.mxu0
    %v1494 = vadd.f32 %v1418, %v1491
    %1495 = vrot.lane.b32.xlu0 %v1275, 104
    %v1496 = vpop.permute.xlu0 %1495
    %1497 = vrot.lane.b32.xlu0 %v1275, 72
    %v1498 = vpop.permute.xlu0 %1497
    %v1500 = vsel %vm159, %v1496, 0
    %v1503 = vsel %vm159, %v1498, 0
    %1505 = vmatpush.bf16.xpose.msra.mxu0 0
    %1506 = vmatpush.bf16.xpose.msra.mxu0 0
    %1507 = vmatpush.bf16.xpose.msra.mxu0 0
    %1508 = vmatpush.bf16.xpose.msra.mxu0 0
    %1509 = vmatpush.bf16.xpose.msra.mxu0 0
    %1510 = vmatpush.bf16.xpose.msra.mxu0 0
    %1511 = vmatpush.bf16.xpose.msra.mxu0 0
    %1512 = vmatpush.bf16.xpose.msra.mxu0 %v1503
    %1513 = vmatmul.bf16.gmra.mxu0 %v1500
    %v1514 = vpop.f32.mrf.mxu0
    %v1515 = vadd.f32 %v68, %v1514
    %v1516 = vpop.f32.mrf.mxu0
    %1517 = vdwg.mxu0
    %v1518 = vsel %vm159, %v1515, -inf
    %1519 = vmax.xlane.f32.xlu0 %v1518
    %v1520 = vpop.xlane.xlu0 %1519
    %v1521 = vsub.f32 %v1515, %v1520
    %v1522 = vmul.f32 %v1521, 1.442695
    %v1523 = vpow.pop %v1522
    %v1524 = vsel %vm159, %v1523, 0.0
    %1525 = vadd.xlane.f32.xlu0 %v1524
    %v1526 = vpop.xlane.xlu0 %1525
    %v1527 = vrcp.pop %v1526
    %v1528 = vmul.f32 %v1523, %v1527
    %v1529 = vpack.c.bf16 %v1528, %v1528
    %1530 = vrot.lane.b32.xlu0 %v1275, 40
    %v1531 = vpop.permute.xlu0 %1530
    %v1533 = vsel %vm159, %v1529, 0
    %v1536 = vsel %vm196, %v1531, 0
    %1538 = vmatpush.bf16.msra.mxu0 0
    %1539 = vmatpush.bf16.msra.mxu0 0
    %1540 = vmatpush.bf16.msra.mxu0 0
    %1541 = vmatpush.bf16.msra.mxu0 0
    %1542 = vmatpush.bf16.msra.mxu0 0
    %1543 = vmatpush.bf16.msra.mxu0 0
    %1544 = vmatpush.bf16.msra.mxu0 0
    %1545 = vmatpush.bf16.msra.mxu0 %v1536
    %1546 = vmatmul.bf16.gmra.mxu0 %v1533
    %v1547 = vpop.f32.mrf.mxu0
    %v1548 = vadd.f32 0.0, %v1547
    %v1549 = vpop.f32.mrf.mxu0
    %1550 = vdwg.mxu0
    %v1551 = vpack.c.bf16 %v1548, %v1548
    %v1553 = vsel %vm159, %v1551, 0
    %1555 = vmatpush.bf16.msra.mxu0 0
    %1556 = vmatpush.bf16.msra.mxu0 0
    %1557 = vmatpush.bf16.msra.mxu0 0
    %1558 = vmatpush.bf16.msra.mxu0 0
    %1559 = vmatpush.bf16.msra.mxu0 0
    %1560 = vmatpush.bf16.msra.mxu0 0
    %1561 = vmatpush.bf16.msra.mxu0 0
    %1562 = vmatpush.bf16.msra.mxu0 %v1259
    %1563 = vmatmul.bf16.gmra.mxu0 %v1553
    %v1564 = vpop.f32.mrf.mxu0
    %v1565 = vadd.f32 0.0, %v1564
    %v1566 = vpop.f32.mrf.mxu0
    %1567 = vdwg.mxu0
    %v1568 = vadd.f32 %v1494, %v1565
    %v1569 = vadd.f32 %v886, %v1274
    %v1570 = vadd.f32 %v887, %v1568
    %s1571 = scalar_lea.vmem %s6, 1
    %v1572 = vld [vmem:[%s1571] sm:$0x1]
    %v1573 = vmul.f32 %v1569, %v1569
    %v1574 = vmul.f32 %v1570, %v1570
    %v1575 = vsel %vm72, %v1573, 0.0
    %1576 = vadd.xlane.f32.xlu0 %v1575
    %v1577 = vpop.xlane.xlu0 %1576
    %v1578 = vsel %vm72, %v1574, 0.0
    %1579 = vadd.xlane.f32.xlu0 %v1578
    %v1580 = vpop.xlane.xlu0 %1579
    %v1581 = vmul.f32 %v1577, %v85
    %v1582 = vmul.f32 %v1580, %v85
    %v1583 = vadd.f32 %v1581, 1e-06
    %v1584 = vadd.f32 %v1582, 1e-06
    %v1585 = vrsqrt.pop %v1583
    %v1586 = vmul.f32 %v1585, %v1583
    %v1587 = vmul.f32 %v1586, %v1585
    %v1588 = vmul.f32 0.5, %v1587
    %v1589 = vsub.f32 1.5, %v1588
    %v1590 = vmul.f32 %v1585, %v1589
    %vm1591 = vweird.f32 %v1583
    %vm1592 = vweird.f32 %v1585
    %vm1593 = vmor %vm1591, %vm1592
    %v1594 = vsel %vm1593, %v1585, %v1590
    %v1595 = vrsqrt.pop %v1584
    %v1596 = vmul.f32 %v1595, %v1584
    %v1597 = vmul.f32 %v1596, %v1595
    %v1598 = vmul.f32 0.5, %v1597
    %v1599 = vsub.f32 1.5, %v1598
    %v1600 = vmul.f32 %v1595, %v1599
    %vm1601 = vweird.f32 %v1584
    %vm1602 = vweird.f32 %v1595
    %vm1603 = vmor %vm1601, %vm1602
    %v1604 = vsel %vm1603, %v1595, %v1600
    %v1605 = vmul.f32 %v1569, %v1594
    %v1606 = vmul.f32 %v1570, %v1604
    %v1608 = vperm.slane %v1572, 0
    %v1610 = vmul.f32 %v1605, %v1608
    %v1611 = vmul.f32 %v1606, %v1608
    %v1612 = vpack.c.bf16 %v1611, %v1610
    %s1613 = scalar_lea.vmem %s7, 16
    %v1614 = vld [vmem:[%s1613] sm:$0xf]
    %v1615 = vld [vmem:[%s1613 + $0x4] sm:$0xf]
    %v1616 = vld [vmem:[%s1613 + $0x8] sm:$0xf]
    %v1617 = vld [vmem:[%s1613 + $0xc] sm:$0xf]
    %v1622 = vunpack.c.l.b16 %v1614
    %v1623 = vunpack.c.l.b16 %v1615
    %v1624 = vunpack.c.l.b16 %v1616
    %v1625 = vunpack.c.l.b16 %v1617
    %v1626 = vpack.c.b16 %v1623, %v1622
    %v1627 = vpack.c.b16 %v1625, %v1624
    %v1631 = vsel %vm72, %v1612, 0
    %1633 = vmatpush.bf16.msra.mxu0 0
    %1634 = vmatpush.bf16.msra.mxu0 0
    %1635 = vmatpush.bf16.msra.mxu0 0
    %1636 = vmatpush.bf16.msra.mxu0 0
    %1637 = vmatpush.bf16.msra.mxu0 0
    %1638 = vmatpush.bf16.msra.mxu0 0
    %1639 = vmatpush.bf16.msra.mxu0 %v1627
    %1640 = vmatpush.bf16.msra.mxu0 %v1626
    %1641 = vmatmul.bf16.gmra.mxu0 %v1631
    %v1642 = vpop.f32.mrf.mxu0
    %v1643 = vadd.f32 0.0, %v1642
    %v1644 = vpop.f32.mrf.mxu0
    %v1645 = vadd.f32 0.0, %v1644
    %1646 = vdwg.mxu0
    %v1647 = vmax.f32 %v1643, 0.0
    %v1648 = vmax.f32 %v1645, 0.0
    %v1649 = vpack.c.bf16 %v1648, %v1647
    %s1650 = scalar_lea.vmem %s8, 32
    %v1651 = vld [vmem:[%s1650] sm:$0xf]
    %v1652 = vld [vmem:[%s1650 + $0x4] sm:$0xf]
    %v1653 = vld [vmem:[%s1650 + $0x8] sm:$0xf]
    %v1654 = vld [vmem:[%s1650 + $0xc] sm:$0xf]
    %v1655 = vld [vmem:[%s1650 + $0x10] sm:$0xf]
    %v1656 = vld [vmem:[%s1650 + $0x14] sm:$0xf]
    %v1657 = vld [vmem:[%s1650 + $0x18] sm:$0xf]
    %v1658 = vld [vmem:[%s1650 + $0x1c] sm:$0xf]
    %v1667 = vunpack.c.l.b16 %v1651
    %v1668 = vunpack.c.l.b16 %v1652
    %v1669 = vunpack.c.l.b16 %v1653
    %v1670 = vunpack.c.l.b16 %v1654
    %v1671 = vunpack.c.l.b16 %v1655
    %v1672 = vunpack.c.l.b16 %v1656
    %v1673 = vunpack.c.l.b16 %v1657
    %v1674 = vunpack.c.l.b16 %v1658
    %v1675 = vpack.c.b16 %v1668, %v1667
    %v1676 = vpack.c.b16 %v1670, %v1669
    %v1677 = vpack.c.b16 %v1672, %v1671
    %v1678 = vpack.c.b16 %v1674, %v1673
    %v1684 = vsel %vm868, %v1649, 0
    %1686 = vmatpush.bf16.msra.mxu0 0
    %1687 = vmatpush.bf16.msra.mxu0 0
    %1688 = vmatpush.bf16.msra.mxu0 0
    %1689 = vmatpush.bf16.msra.mxu0 0
    %1690 = vmatpush.bf16.msra.mxu0 %v1678
    %1691 = vmatpush.bf16.msra.mxu0 %v1677
    %1692 = vmatpush.bf16.msra.mxu0 %v1676
    %1693 = vmatpush.bf16.msra.mxu0 %v1675
    %1694 = vmatmul.bf16.gmra.mxu0 %v1684
    %v1695 = vpop.f32.mrf.mxu0
    %v1696 = vadd.f32 0.0, %v1695
    %v1697 = vpop.f32.mrf.mxu0
    %v1698 = vadd.f32 0.0, %v1697
    %1699 = vdwg.mxu0
    %v1700 = vadd.f32 %v1569, %v1696
    %v1701 = vadd.f32 %v1570, %v1698
    %v1703 = vrot.slane %v1701, 7
    %vm1705 = vcmask 1040384
    %v1706 = vsel %vm1705, %v1700, %v1703
    %v1707 = vld [vmem:[%s9] sm:$0x1]
    %v1708 = vmul.f32 %v1706, %v1706
    %vm1709 = vcmask 254976
    %v1710 = vsel %vm1709, %v1708, 0.0
    %1711 = vadd.xlane.f32.xlu0 %v1710
    %v1712 = vpop.xlane.xlu0 %1711
    %v1713 = vmul.f32 %v1712, %v85
    %v1714 = vadd.f32 %v1713, 1e-06
    %v1715 = vrsqrt.pop %v1714
    %v1716 = vmul.f32 %v1715, %v1714
    %v1717 = vmul.f32 %v1716, %v1715
    %v1718 = vmul.f32 0.5, %v1717
    %v1719 = vsub.f32 1.5, %v1718
    %v1720 = vmul.f32 %v1715, %v1719
    %vm1721 = vweird.f32 %v1714
    %vm1722 = vweird.f32 %v1715
    %vm1723 = vmor %vm1721, %vm1722
    %v1724 = vsel %vm1723, %v1715, %v1720
    %v1725 = vmul.f32 %v1706, %v1724
    %v1727 = vperm.slane %v1707, 0
    %v1729 = vmul.f32 %v1725, %v1727
    %v1730 = vpack.c.bf16 %v1729, %v1729
    %v1731 = vld [vmem:[%s10] sm:$0xf]
    %v1732 = vld [vmem:[%s10 + $0x4] sm:$0xf]
    %v1733 = vld [vmem:[%s10 + $0x8] sm:$0xf]
    %v1734 = vld [vmem:[%s10 + $0xc] sm:$0xf]
    %v1735 = vld [vmem:[%s11] sm:$0x1]
    %v1737 = vperm.slane %v1735, 0
    %v1743 = vunpack.c.l.b16 %v1731
    %v1744 = vunpack.c.l.b16 %v1732
    %v1745 = vunpack.c.l.b16 %v1733
    %v1746 = vunpack.c.l.b16 %v1734
    %v1747 = vpack.c.b16 %v1744, %v1743
    %v1748 = vpack.c.b16 %v1746, %v1745
    %v1752 = vsel %vm72, %v1730, 0
    %1754 = vmatpush.bf16.msra.mxu0 0
    %1755 = vmatpush.bf16.msra.mxu0 0
    %1756 = vmatpush.bf16.msra.mxu0 0
    %1757 = vmatpush.bf16.msra.mxu0 0
    %1758 = vmatpush.bf16.msra.mxu0 0
    %1759 = vmatpush.bf16.msra.mxu0 0
    %1760 = vmatpush.bf16.msra.mxu0 %v1748
    %1761 = vmatpush.bf16.msra.mxu0 %v1747
    %1762 = vmatmul.bf16.gmra.mxu0 %v1752
    %v1763 = vpop.f32.mrf.mxu0
    %v1764 = vadd.f32 %v1737, %v1763
    %v1765 = vpop.f32.mrf.mxu0
    %1766 = vdwg.mxu0
    %vm1767 = vcmask 9216
    %1768 = vst.msk [vmem:[#allocation2] sm:$0x3] %vm1767, %v1764
    // Predicated region
    $region50: #{discriminator_forward.1} parent=1 // pred_check
      _
    $region51: #{discriminator_forward.1} parent=1 // pred_check_branch
      %1770 = sbr.rel (0) target = $region53
    $region52: #{discriminator_forward.1} parent=1 // pred_region
      %1772 = vsyncadd [#allocation3], 0
      %s1774 = sshll.u32 [#allocation2], 4
      %s1775 = int_to_ptr.vmem [resolvable:$true] %s1774
      %s1776 = sshll.u32 %s12, 4
      %s1777 = int_to_ptr.hbm [resolvable:$true] %s1776
      %1779 = dma.vmem_to_hbm [thread:$0]  %s1775, 32, %s1777, [#allocation3]
    $region53: #{discriminator_forward.1} parent=1 // pred_fallthru
      _
    // Predicated region
    $region54: #{discriminator_forward.1} parent=1 // pred_check
      _
    $region55: #{discriminator_forward.1} parent=1 // pred_check_branch
      %1781 = sbr.rel (0) target = $region57
    $region56: #{discriminator_forward.1} parent=1 // pred_region
      %1783 = dma.done [#allocation3], 32
    $region57: #{discriminator_forward.1} parent=1 // pred_fallthru
      _
    %1784 = vsyncpa [#allocation3], 1

</llo_original>
